<compile_context>
chip_gen: v7x
topology: tpu7x:2x2x1
jax: 0.10.0
libtpu: 0.0.40
codegen_flags: <defaults>
</compile_context>

<pallas_src>
import functools

import jax
import jax.numpy as jnp
from jax import lax
from jax.experimental import pallas as pl
from jax.experimental.pallas import tpu as pltpu

EMBED_DIM = 768          # fixed inside DualEncoder.__init__
CONTRASTIVE_DIMS = 128   # params.contrastive_dims
TEMP = 10.0              # params.temp
ADD_DUAL_LOSS = True     # params.add_dual_loss


# --------------------------------------------------------------------------
# Fused kernel (doc-row axis tiled over the grid)
# --------------------------------------------------------------------------
def _dual_encoder_kernel(xd_ref, xl_ref, w_ref, b_ref, t_ref,        # inputs
                         sig_ref, ldoc_ref, llbl_ref,                # outputs
                         lT_ref, colsum_ref, colts_ref, colpos_ref,  # scratch
                         *, temp, nd, nl, nl_pad, add_dual_loss):
    i = pl.program_id(0)
    last = pl.num_programs(0) - 1

    def head(x_bf16):
        # Linear(768 -> C) + Tanh   (bf16 MXU operands, f32 accumulation)
        h = jnp.dot(x_bf16, w_ref[...], preferred_element_type=jnp.float32)
        h = jnp.tanh(h + b_ref[...])
        # F.normalize(eps=1e-12)  ==  h * rsqrt(max(||h||^2, 1e-24))
        sq = jnp.sum(h * h, axis=-1, keepdims=True)
        return h * lax.rsqrt(jnp.maximum(sq, 1e-24))

    # ---- one-time init: label-side head + resident loss accumulators ------
    @pl.when(i == 0)
    def _init():
        # (nl_pad, C) -> transposed (C, nl_pad) bf16 so every per-tile sim
        # matmul is a plain row-major MXU contraction against a resident RHS.
        lT_ref[...] = head(xl_ref[...]).T.astype(jnp.bfloat16)
        ldoc_ref[...] = jnp.zeros_like(ldoc_ref)
        if add_dual_loss:
            colsum_ref[...] = jnp.zeros_like(colsum_ref)
            colts_ref[...] = jnp.zeros_like(colts_ref)
            colpos_ref[...] = jnp.zeros_like(colpos_ref)

    d = head(xd_ref[...])                                   # (tm, C) f32
    t = t_ref[...].astype(jnp.float32)                      # (tm, nl_pad)

    # cos_sim * temp
    sim = jnp.dot(d.astype(jnp.bfloat16), lT_ref[...],
                  preferred_element_type=jnp.float32) * temp

    # mask padded label columns (only present when nl was padded to 128 lanes)
    if nl != nl_pad:
        col = lax.broadcasted_iota(jnp.int32, sim.shape, 1)
        sim_v = jnp.where(col < nl, sim, -1e30)
    else:
        sim_v = sim

    m = jnp.max(sim_v, axis=-1, keepdims=True)              # (tm, 1) row max
    e = jnp.exp(sim_v - m)                                   # shared exp; 0 on pad cols

    # ---- loss_doc: reduce-then-combine (no logsm materialization) ---------
    #   sum_j t*log_softmax = sum_j(t*sim) - num_pos*(m + log(row_sum))
    ts = t * sim                                             # t == 0 on pad cols
    row_sum = jnp.sum(e, axis=-1, keepdims=True)
    lse_row = m + jnp.log(row_sum)
    num_pos = jnp.sum(t, axis=-1, keepdims=True)
    ts_row = jnp.sum(ts, axis=-1, keepdims=True)
    per_doc = (ts_row * pl.reciprocal(jnp.maximum(num_pos, 1.0), approx=True)
               - lse_row)
    # rows with zero positive labels contribute 0 (torch would NaN there)
    per_doc = jnp.where(num_pos > 0, per_doc, 0.0)
    ldoc_ref[...] += jnp.sum(per_doc, axis=0, keepdims=True)

    # ---- dual-loss column statistics (column logsumexp with a fixed global
    #      shift of `temp`; safe because both sides are L2-normalized so
    #      |sim| <= temp) ------------------------------------------------
    if add_dual_loss:
        colsum_ref[...] += jnp.sum(e * jnp.exp(m - temp), axis=0, keepdims=True)
        colts_ref[...] += jnp.sum(ts, axis=0, keepdims=True)
        colpos_ref[...] += jnp.sum(t, axis=0, keepdims=True)

    # ---- sigmoid(cos_sim) from the shared exp: sig = e / (e + exp(-m)) ----
    sig_ref[...] = (e * pl.reciprocal(e + jnp.exp(-m), approx=True)
                    ).astype(sig_ref.dtype)

    # ---- finalize the two scalar losses on the last doc tile --------------
    @pl.when(i == last)
    def _finalize():
        ldoc_ref[...] = ldoc_ref[...] * (-1.0 / nd)
        if add_dual_loss:
            cp = colpos_ref[...]
            lse2 = jnp.log(jnp.maximum(colsum_ref[...], 1e-30)) + temp
            per_lbl = (colts_ref[...] - cp * lse2) * pl.reciprocal(
                jnp.maximum(cp, 1.0), approx=True)
            maskp = (cp > 0).astype(jnp.float32)
            n_valid = jnp.maximum(jnp.sum(maskp, axis=1, keepdims=True), 1.0)
            llbl_ref[...] = (-jnp.sum(per_lbl * maskp, axis=1, keepdims=True)
                             * pl.reciprocal(n_valid, approx=True))
        else:
            llbl_ref[...] = jnp.zeros_like(llbl_ref)


# --------------------------------------------------------------------------
# Forward wrapper (mirrors DualEncoder.forward, single-process path)
# --------------------------------------------------------------------------
def dual_encoder_forward(doc_sent_emb, lbl_sent_emb, target, w, b, temp,
                         add_dual_loss=ADD_DUAL_LOSS):
    nd, ed = doc_sent_emb.shape
    nl, _ = lbl_sent_emb.shape
    c = w.shape[1]

    # lane-dense label axis: pad to a multiple of 128 (masked in-kernel)
    nl_pad = ((nl + 127) // 128) * 128
    # doc-row tile: 256 rows per grid step at production scale, single tile
    # otherwise.  TODO(synk): pad the doc axis for nd not a multiple of 256.
    tm = 256 if (nd > 256 and nd % 256 == 0) else nd
    grid = (nd // tm,)

    # bf16 MXU operands (f32 accumulation happens in-kernel); int8 targets.
    xd = doc_sent_emb.astype(jnp.bfloat16)
    xl = jnp.pad(lbl_sent_emb, ((0, nl_pad - nl), (0, 0))).astype(jnp.bfloat16)
    w_bf = w.astype(jnp.bfloat16)
    t_i8 = jnp.pad(target, ((0, 0), (0, nl_pad - nl))).astype(jnp.int8)

    kernel = functools.partial(
        _dual_encoder_kernel, temp=float(temp), nd=nd, nl=nl, nl_pad=nl_pad,
        add_dual_loss=bool(add_dual_loss))

    sig_pad, loss_doc, loss_lbl = pl.pallas_call(
        kernel,
        grid=grid,
        in_specs=[
            pl.BlockSpec((tm, ed), lambda i: (i, 0)),        # doc embeddings (tiled)
            pl.BlockSpec((nl_pad, ed), lambda i: (0, 0)),    # lbl embeddings (resident)
            pl.BlockSpec((ed, c), lambda i: (0, 0)),         # head weight (resident)
            pl.BlockSpec((1, c), lambda i: (0, 0)),          # head bias (resident)
            pl.BlockSpec((tm, nl_pad), lambda i: (i, 0)),    # target tile (int8)
        ],
        out_specs=[
            pl.BlockSpec((tm, nl_pad), lambda i: (i, 0)),    # sigmoid(cos_sim)
            pl.BlockSpec((1, 1), lambda i: (0, 0)),          # loss_doc (accumulator)
            pl.BlockSpec((1, 1), lambda i: (0, 0)),          # loss_lbl
        ],
        out_shape=(
            jax.ShapeDtypeStruct((nd, nl_pad), jnp.float32),
            jax.ShapeDtypeStruct((1, 1), jnp.float32),
            jax.ShapeDtypeStruct((1, 1), jnp.float32),
        ),
        scratch_shapes=[
            pltpu.VMEM((c, nl_pad), jnp.bfloat16),   # normalized lbl head (transposed)
            pltpu.VMEM((1, nl_pad), jnp.float32),    # column sum exp(sim - temp)
            pltpu.VMEM((1, nl_pad), jnp.float32),    # column sum target*sim
            pltpu.VMEM((1, nl_pad), jnp.float32),    # column sum target
        ],
        compiler_params=pltpu.CompilerParams(
            # doc axis carries the loss reduction + resident label scratch ->
            # must stay "arbitrary" (not megacore-"parallel") in this design.
            dimension_semantics=("arbitrary",),
            vmem_limit_bytes=48 * 1024 * 1024),
    )(xd, xl, w_bf, b, t_i8)

    sig = sig_pad[:, :nl]
    # returns (loss_doc, cos_sim.sigmoid(), loss_lbl, None, None)
    return loss_doc[0, 0], sig, loss_lbl[0, 0], None, None


# --------------------------------------------------------------------------
# Pure-JAX f32 reference (for the correctness check)
# --------------------------------------------------------------------------
def _reference(doc_sent_emb, lbl_sent_emb, target, w, b, temp):
    def head(x):
        h = jnp.tanh(x @ w + b)
        return h / jnp.maximum(jnp.linalg.norm(h, axis=-1, keepdims=True), 1e-12)
    d = head(doc_sent_emb)
    l = head(lbl_sent_emb)
    sim = d @ l.T * temp
    logsm = jax.nn.log_softmax(sim, axis=-1)
    loss_doc = -jnp.mean(jnp.sum(target * logsm, -1) / jnp.sum(target, -1))
    logsm2 = jax.nn.log_softmax(sim, axis=0)
    col = jnp.sum(target, 0)
    mask = col > 0
    per = jnp.sum(target * logsm2, 0) / jnp.where(mask, col, 1.0)
    loss_lbl = -jnp.sum(jnp.where(mask, per, 0.0)) / jnp.sum(mask)
    return loss_doc, jax.nn.sigmoid(sim), loss_lbl


if __name__ == "__main__":
    key = jax.random.PRNGKey(0)
    k_doc, k_lbl, k_w, k_t = jax.random.split(key, 4)

    n_docs, n_lbls = 8, 16

    # deterministic stand-ins for the BERT sentence embeddings
    doc_sent_emb = jax.random.normal(k_doc, (n_docs, EMBED_DIM), jnp.float32)
    lbl_sent_emb = jax.random.normal(k_lbl, (n_lbls, EMBED_DIM), jnp.float32)

    # cnst_head params: Xavier-uniform weight, zero bias (as in init_classifiers)
    bound = (6.0 / (EMBED_DIM + CONTRASTIVE_DIMS)) ** 0.5
    w = jax.random.uniform(k_w, (EMBED_DIM, CONTRASTIVE_DIMS), jnp.float32,
                           minval=-bound, maxval=bound)
    b = jnp.zeros((1, CONTRASTIVE_DIMS), jnp.float32)

    # binary target (each doc has at least one positive label)
    target = (jax.random.uniform(k_t, (n_docs, n_lbls)) < 0.25).astype(jnp.float32)
    diag = jnp.zeros((n_docs, n_lbls), jnp.float32).at[
        jnp.arange(n_docs), jnp.arange(n_docs) % n_lbls].set(1.0)
    target = jnp.maximum(target, diag)

    loss_doc, sig, loss_lbl, _, _ = dual_encoder_forward(
        doc_sent_emb, lbl_sent_emb, target, w, b, TEMP)
    jax.block_until_ready((loss_doc, sig, loss_lbl))

    ref_ld, ref_sig, ref_ll = _reference(
        doc_sent_emb, lbl_sent_emb, target, w, b, TEMP)
    # bf16 MXU operands + approx reciprocal -> compare at a few 1e-2.
    assert jnp.allclose(loss_doc, ref_ld, atol=3e-2, rtol=3e-2), (loss_doc, ref_ld)
    assert jnp.allclose(loss_lbl, ref_ll, atol=3e-2, rtol=3e-2), (loss_lbl, ref_ll)
    assert jnp.allclose(sig, ref_sig, atol=2e-2, rtol=2e-2)

    print("KERNEL_OK")
</pallas_src>

<mosaic_0001>
module attributes {stable_mosaic.version = 11 : i64} {
  func.func @_dual_encoder_kernel(%arg0: i32, %arg1: memref<8x768xbf16, #tpu.memory_space<vmem>>, %arg2: memref<128x768xbf16, #tpu.memory_space<vmem>>, %arg3: memref<768x128xbf16, #tpu.memory_space<vmem>>, %arg4: memref<1x128xf32, #tpu.memory_space<vmem>>, %arg5: memref<8x128xi8, #tpu.memory_space<vmem>>, %arg6: memref<8x128xf32, #tpu.memory_space<vmem>>, %arg7: memref<1x1xf32, #tpu.memory_space<vmem>>, %arg8: memref<1x1xf32, #tpu.memory_space<vmem>>, %arg9: memref<128x128xbf16, #tpu.memory_space<vmem>>, %arg10: memref<1x128xf32, #tpu.memory_space<vmem>>, %arg11: memref<1x128xf32, #tpu.memory_space<vmem>>, %arg12: memref<1x128xf32, #tpu.memory_space<vmem>>) attributes {dimension_semantics = [#tpu.dimension_semantics<arbitrary>], iteration_bounds = array<i64: 1>, scalar_prefetch = 0 : i64, scratch_operands = 4 : i64, tpu.core_type = #tpu.core_type<tc>, window_params = [{transform_indices = @transform_0, window_bounds = array<i64: 8, 768>}, {pipeline_mode = #tpu.pipeline_mode<synchronous>, transform_indices = @transform_1, window_bounds = array<i64: 128, 768>}, {pipeline_mode = #tpu.pipeline_mode<synchronous>, transform_indices = @transform_2, window_bounds = array<i64: 768, 128>}, {pipeline_mode = #tpu.pipeline_mode<synchronous>, transform_indices = @transform_3, window_bounds = array<i64: 1, 128>}, {transform_indices = @transform_4, window_bounds = array<i64: 8, 128>}, {transform_indices = @transform_5, window_bounds = array<i64: 8, 128>}, {pipeline_mode = #tpu.pipeline_mode<synchronous>, transform_indices = @transform_6, window_bounds = array<i64: 1, 1>}, {pipeline_mode = #tpu.pipeline_mode<synchronous>, transform_indices = @transform_7, window_bounds = array<i64: 1, 1>}]} {
    %c0_i32 = arith.constant 0 : i32
    %0 = arith.cmpi eq, %arg0, %c0_i32 : i32
    %1 = arith.extui %0 : i1 to i32
    %c0_i32_0 = arith.constant 0 : i32
    %2 = arith.cmpi ne, %1, %c0_i32_0 : i32
    scf.if %2 {
      %c0_48 = arith.constant 0 : index
      %c0_49 = arith.constant 0 : index
      %89 = vector.load %arg2[%c0_48, %c0_49] : memref<128x768xbf16, #tpu.memory_space<vmem>>, vector<128x768xbf16>
      %c0_50 = arith.constant 0 : index
      %c0_51 = arith.constant 0 : index
      %90 = vector.load %arg3[%c0_50, %c0_51] : memref<768x128xbf16, #tpu.memory_space<vmem>>, vector<768x128xbf16>
      %cst_52 = arith.constant dense<0.000000e+00> : vector<128x128xf32>
      %91 = tpu.matmul %89, %90, %cst_52 {dimension_numbers = #tpu.dot_dimension_numbers<[1], [0], [0], [1], [0, 0, 1, 1], [], []>} : vector<128x768xbf16>, vector<768x128xbf16>, vector<128x128xf32> -> vector<128x128xf32>
      %c0_53 = arith.constant 0 : index
      %c0_54 = arith.constant 0 : index
      %92 = vector.load %arg4[%c0_53, %c0_54] : memref<1x128xf32, #tpu.memory_space<vmem>>, vector<1x128xf32>
      %93 = vector.broadcast %92 : vector<1x128xf32> to vector<128x128xf32>
      %94 = arith.addf %91, %93 : vector<128x128xf32>
      %95 = math.tanh %94 : vector<128x128xf32>
      %96 = arith.mulf %95, %95 : vector<128x128xf32>
      %cst_55 = arith.constant dense<0.000000e+00> : vector<128xf32>
      %97 = vector.multi_reduction <add>, %96, %cst_55 [1] : vector<128x128xf32> to vector<128xf32>
      %98 = vector.shape_cast %97 : vector<128xf32> to vector<128x1xf32>
      %cst_56 = arith.constant 1.000000e-24 : f32
      %99 = vector.broadcast %cst_56 : f32 to vector<128x1xf32>
      %100 = arith.maximumf %98, %99 : vector<128x1xf32>
      %101 = math.rsqrt %100 : vector<128x1xf32>
      %102 = vector.broadcast %101 : vector<128x1xf32> to vector<128x128xf32>
      %103 = arith.mulf %95, %102 : vector<128x128xf32>
      %104 = tpu.transpose %103, [1, 0] : vector<128x128xf32> -> vector<128x128xf32>
      %105 = arith.truncf %104 : vector<128x128xf32> to vector<128x128xbf16>
      %c0_57 = arith.constant 0 : index
      %c0_58 = arith.constant 0 : index
      %106 = vector.load %arg9[%c0_57, %c0_58] : memref<128x128xbf16, #tpu.memory_space<vmem>>, vector<128x128xbf16>
      tpu.vector_store %arg9[%c0_57, %c0_58], %105 {strides = array<i32>} : memref<128x128xbf16, #tpu.memory_space<vmem>>, vector<128x128xbf16>,
      %cst_59 = arith.constant 0.000000e+00 : f32
      %107 = vector.broadcast %cst_59 : f32 to vector<1x1xf32>
      %c0_60 = arith.constant 0 : index
      %c0_61 = arith.constant 0 : index
      %108 = vector.load %arg7[%c0_60, %c0_61] : memref<1x1xf32, #tpu.memory_space<vmem>>, vector<1x1xf32>
      tpu.vector_store %arg7[%c0_60, %c0_61], %107 {strides = array<i32>} : memref<1x1xf32, #tpu.memory_space<vmem>>, vector<1x1xf32>,
      %cst_62 = arith.constant 0.000000e+00 : f32
      %109 = vector.broadcast %cst_62 : f32 to vector<1x128xf32>
      %c0_63 = arith.constant 0 : index
      %c0_64 = arith.constant 0 : index
      %110 = vector.load %arg10[%c0_63, %c0_64] : memref<1x128xf32, #tpu.memory_space<vmem>>, vector<1x128xf32>
      tpu.vector_store %arg10[%c0_63, %c0_64], %109 {strides = array<i32>} : memref<1x128xf32, #tpu.memory_space<vmem>>, vector<1x128xf32>,
      %cst_65 = arith.constant 0.000000e+00 : f32
      %111 = vector.broadcast %cst_65 : f32 to vector<1x128xf32>
      %c0_66 = arith.constant 0 : index
      %c0_67 = arith.constant 0 : index
      %112 = vector.load %arg11[%c0_66, %c0_67] : memref<1x128xf32, #tpu.memory_space<vmem>>, vector<1x128xf32>
      tpu.vector_store %arg11[%c0_66, %c0_67], %111 {strides = array<i32>} : memref<1x128xf32, #tpu.memory_space<vmem>>, vector<1x128xf32>,
      %cst_68 = arith.constant 0.000000e+00 : f32
      %113 = vector.broadcast %cst_68 : f32 to vector<1x128xf32>
      %c0_69 = arith.constant 0 : index
      %c0_70 = arith.constant 0 : index
      %114 = vector.load %arg12[%c0_69, %c0_70] : memref<1x128xf32, #tpu.memory_space<vmem>>, vector<1x128xf32>
      tpu.vector_store %arg12[%c0_69, %c0_70], %113 {strides = array<i32>} : memref<1x128xf32, #tpu.memory_space<vmem>>, vector<1x128xf32>,
    } else {
    }
    %c0 = arith.constant 0 : index
    %c0_1 = arith.constant 0 : index
    %3 = vector.load %arg1[%c0, %c0_1] : memref<8x768xbf16, #tpu.memory_space<vmem>>, vector<8x768xbf16>
    %c0_2 = arith.constant 0 : index
    %c0_3 = arith.constant 0 : index
    %4 = vector.load %arg3[%c0_2, %c0_3] : memref<768x128xbf16, #tpu.memory_space<vmem>>, vector<768x128xbf16>
    %cst = arith.constant dense<0.000000e+00> : vector<8x128xf32>
    %5 = tpu.matmul %3, %4, %cst {dimension_numbers = #tpu.dot_dimension_numbers<[1], [0], [0], [1], [0, 0, 1, 1], [], []>} : vector<8x768xbf16>, vector<768x128xbf16>, vector<8x128xf32> -> vector<8x128xf32>
    %c0_4 = arith.constant 0 : index
    %c0_5 = arith.constant 0 : index
    %6 = vector.load %arg4[%c0_4, %c0_5] : memref<1x128xf32, #tpu.memory_space<vmem>>, vector<1x128xf32>
    %7 = vector.broadcast %6 : vector<1x128xf32> to vector<8x128xf32>
    %8 = arith.addf %5, %7 : vector<8x128xf32>
    %9 = math.tanh %8 : vector<8x128xf32>
    %10 = arith.mulf %9, %9 : vector<8x128xf32>
    %cst_6 = arith.constant dense<0.000000e+00> : vector<8xf32>
    %11 = vector.multi_reduction <add>, %10, %cst_6 [1] : vector<8x128xf32> to vector<8xf32>
    %12 = vector.shape_cast %11 : vector<8xf32> to vector<8x1xf32>
    %cst_7 = arith.constant 1.000000e-24 : f32
    %13 = vector.broadcast %cst_7 : f32 to vector<8x1xf32>
    %14 = arith.maximumf %12, %13 : vector<8x1xf32>
    %15 = math.rsqrt %14 : vector<8x1xf32>
    %16 = vector.broadcast %15 : vector<8x1xf32> to vector<8x128xf32>
    %17 = arith.mulf %9, %16 : vector<8x128xf32>
    %c0_8 = arith.constant 0 : index
    %c0_9 = arith.constant 0 : index
    %18 = vector.load %arg5[%c0_8, %c0_9] : memref<8x128xi8, #tpu.memory_space<vmem>>, vector<8x128xi8>
    %19 = arith.sitofp %18 : vector<8x128xi8> to vector<8x128xf32>
    %20 = arith.truncf %17 : vector<8x128xf32> to vector<8x128xbf16>
    %c0_10 = arith.constant 0 : index
    %c0_11 = arith.constant 0 : index
    %21 = vector.load %arg9[%c0_10, %c0_11] : memref<128x128xbf16, #tpu.memory_space<vmem>>, vector<128x128xbf16>
    %cst_12 = arith.constant dense<0.000000e+00> : vector<8x128xf32>
    %22 = tpu.matmul %20, %21, %cst_12 {dimension_numbers = #tpu.dot_dimension_numbers<[1], [0], [0], [1], [0, 0, 1, 1], [], []>} : vector<8x128xbf16>, vector<128x128xbf16>, vector<8x128xf32> -> vector<8x128xf32>
    %cst_13 = arith.constant 1.000000e+01 : f32
    %23 = vector.broadcast %cst_13 : f32 to vector<8x128xf32>
    %24 = arith.mulf %22, %23 : vector<8x128xf32>
    %25 = tpu.iota {dimensions = array<i32: 1>} : vector<8x128xi32>
    %c16_i32 = arith.constant 16 : i32
    %26 = vector.broadcast %c16_i32 : i32 to vector<8x128xi32>
    %27 = arith.cmpi slt, %25, %26 : vector<8x128xi32>
    %cst_14 = arith.constant -1.000000e+30 : f32
    %28 = vector.broadcast %cst_14 : f32 to vector<8x128xf32>
    %29 = arith.select %27, %24, %28 : vector<8x128xi1>, vector<8x128xf32>
    %cst_15 = arith.constant dense<0xFF800000> : vector<8xf32>
    %30 = vector.multi_reduction <maximumf>, %29, %cst_15 [1] : vector<8x128xf32> to vector<8xf32>
    %31 = vector.shape_cast %30 : vector<8xf32> to vector<8x1xf32>
    %32 = vector.broadcast %31 : vector<8x1xf32> to vector<8x128xf32>
    %33 = arith.subf %29, %32 : vector<8x128xf32>
    %34 = math.exp %33 : vector<8x128xf32>
    %35 = arith.mulf %19, %24 : vector<8x128xf32>
    %cst_16 = arith.constant dense<0.000000e+00> : vector<8xf32>
    %36 = vector.multi_reduction <add>, %34, %cst_16 [1] : vector<8x128xf32> to vector<8xf32>
    %37 = vector.shape_cast %36 : vector<8xf32> to vector<8x1xf32>
    %38 = math.log %37 : vector<8x1xf32>
    %39 = arith.addf %31, %38 : vector<8x1xf32>
    %cst_17 = arith.constant dense<0.000000e+00> : vector<8xf32>
    %40 = vector.multi_reduction <add>, %19, %cst_17 [1] : vector<8x128xf32> to vector<8xf32>
    %41 = vector.shape_cast %40 : vector<8xf32> to vector<8x1xf32>
    %cst_18 = arith.constant dense<0.000000e+00> : vector<8xf32>
    %42 = vector.multi_reduction <add>, %35, %cst_18 [1] : vector<8x128xf32> to vector<8xf32>
    %43 = vector.shape_cast %42 : vector<8xf32> to vector<8x1xf32>
    %cst_19 = arith.constant 1.000000e+00 : f32
    %44 = vector.broadcast %cst_19 : f32 to vector<8x1xf32>
    %45 = arith.maximumf %41, %44 : vector<8x1xf32>
    %46 = tpu.reciprocal %45 {approx = true} : vector<8x1xf32> -> vector<8x1xf32>
    %47 = arith.mulf %43, %46 : vector<8x1xf32>
    %48 = arith.subf %47, %39 : vector<8x1xf32>
    %cst_20 = arith.constant 0.000000e+00 : f32
    %49 = vector.broadcast %cst_20 : f32 to vector<8x1xf32>
    %50 = arith.cmpf ogt, %41, %49 : vector<8x1xf32>
    %cst_21 = arith.constant 0.000000e+00 : f32
    %51 = vector.broadcast %cst_21 : f32 to vector<8x1xf32>
    %52 = arith.select %50, %48, %51 : vector<8x1xi1>, vector<8x1xf32>
    %c0_22 = arith.constant 0 : index
    %c0_23 = arith.constant 0 : index
    %53 = vector.load %arg7[%c0_22, %c0_23] : memref<1x1xf32, #tpu.memory_space<vmem>>, vector<1x1xf32>
    %cst_24 = arith.constant dense<0.000000e+00> : vector<1xf32>
    %54 = vector.multi_reduction <add>, %52, %cst_24 [0] : vector<8x1xf32> to vector<1xf32>
    %55 = vector.shape_cast %54 : vector<1xf32> to vector<1x1xf32>
    %56 = arith.addf %53, %55 : vector<1x1xf32>
    %c0_25 = arith.constant 0 : index
    %c0_26 = arith.constant 0 : index
    %57 = vector.load %arg7[%c0_25, %c0_26] : memref<1x1xf32, #tpu.memory_space<vmem>>, vector<1x1xf32>
    tpu.vector_store %arg7[%c0_25, %c0_26], %56 {strides = array<i32>} : memref<1x1xf32, #tpu.memory_space<vmem>>, vector<1x1xf32>,
    %c0_27 = arith.constant 0 : index
    %c0_28 = arith.constant 0 : index
    %58 = vector.load %arg10[%c0_27, %c0_28] : memref<1x128xf32, #tpu.memory_space<vmem>>, vector<1x128xf32>
    %cst_29 = arith.constant 1.000000e+01 : f32
    %59 = vector.broadcast %cst_29 : f32 to vector<8x1xf32>
    %60 = arith.subf %31, %59 : vector<8x1xf32>
    %61 = math.exp %60 : vector<8x1xf32>
    %62 = vector.broadcast %61 : vector<8x1xf32> to vector<8x128xf32>
    %63 = arith.mulf %34, %62 : vector<8x128xf32>
    %cst_30 = arith.constant dense<0.000000e+00> : vector<128xf32>
    %64 = vector.multi_reduction <add>, %63, %cst_30 [0] : vector<8x128xf32> to vector<128xf32>
    %65 = vector.shape_cast %64 : vector<128xf32> to vector<1x128xf32>
    %66 = arith.addf %58, %65 : vector<1x128xf32>
    %c0_31 = arith.constant 0 : index
    %c0_32 = arith.constant 0 : index
    %67 = vector.load %arg10[%c0_31, %c0_32] : memref<1x128xf32, #tpu.memory_space<vmem>>, vector<1x128xf32>
    tpu.vector_store %arg10[%c0_31, %c0_32], %66 {strides = array<i32>} : memref<1x128xf32, #tpu.memory_space<vmem>>, vector<1x128xf32>,
    %c0_33 = arith.constant 0 : index
    %c0_34 = arith.constant 0 : index
    %68 = vector.load %arg11[%c0_33, %c0_34] : memref<1x128xf32, #tpu.memory_space<vmem>>, vector<1x128xf32>
    %cst_35 = arith.constant dense<0.000000e+00> : vector<128xf32>
    %69 = vector.multi_reduction <add>, %35, %cst_35 [0] : vector<8x128xf32> to vector<128xf32>
    %70 = vector.shape_cast %69 : vector<128xf32> to vector<1x128xf32>
    %71 = arith.addf %68, %70 : vector<1x128xf32>
    %c0_36 = arith.constant 0 : index
    %c0_37 = arith.constant 0 : index
    %72 = vector.load %arg11[%c0_36, %c0_37] : memref<1x128xf32, #tpu.memory_space<vmem>>, vector<1x128xf32>
    tpu.vector_store %arg11[%c0_36, %c0_37], %71 {strides = array<i32>} : memref<1x128xf32, #tpu.memory_space<vmem>>, vector<1x128xf32>,
    %c0_38 = arith.constant 0 : index
    %c0_39 = arith.constant 0 : index
    %73 = vector.load %arg12[%c0_38, %c0_39] : memref<1x128xf32, #tpu.memory_space<vmem>>, vector<1x128xf32>
    %cst_40 = arith.constant dense<0.000000e+00> : vector<128xf32>
    %74 = vector.multi_reduction <add>, %19, %cst_40 [0] : vector<8x128xf32> to vector<128xf32>
    %75 = vector.shape_cast %74 : vector<128xf32> to vector<1x128xf32>
    %76 = arith.addf %73, %75 : vector<1x128xf32>
    %c0_41 = arith.constant 0 : index
    %c0_42 = arith.constant 0 : index
    %77 = vector.load %arg12[%c0_41, %c0_42] : memref<1x128xf32, #tpu.memory_space<vmem>>, vector<1x128xf32>
    tpu.vector_store %arg12[%c0_41, %c0_42], %76 {strides = array<i32>} : memref<1x128xf32, #tpu.memory_space<vmem>>, vector<1x128xf32>,
    %cst_43 = arith.constant 0.000000e+00 : f32
    %78 = vector.broadcast %cst_43 : f32 to vector<8x1xf32>
    %79 = arith.subf %78, %31 : vector<8x1xf32>
    %80 = math.exp %79 : vector<8x1xf32>
    %81 = vector.broadcast %80 : vector<8x1xf32> to vector<8x128xf32>
    %82 = arith.addf %34, %81 : vector<8x128xf32>
    %83 = tpu.reciprocal %82 {approx = true} : vector<8x128xf32> -> vector<8x128xf32>
    %84 = arith.mulf %34, %83 : vector<8x128xf32>
    %c0_44 = arith.constant 0 : index
    %c0_45 = arith.constant 0 : index
    %85 = vector.load %arg6[%c0_44, %c0_45] : memref<8x128xf32, #tpu.memory_space<vmem>>, vector<8x128xf32>
    tpu.vector_store %arg6[%c0_44, %c0_45], %84 {strides = array<i32>} : memref<8x128xf32, #tpu.memory_space<vmem>>, vector<8x128xf32>,
    %c0_i32_46 = arith.constant 0 : i32
    %86 = arith.cmpi eq, %arg0, %c0_i32_46 : i32
    %87 = arith.extui %86 : i1 to i32
    %c0_i32_47 = arith.constant 0 : i32
    %88 = arith.cmpi ne, %87, %c0_i32_47 : i32
    scf.if %88 {
      %c0_48 = arith.constant 0 : index
      %c0_49 = arith.constant 0 : index
      %89 = vector.load %arg7[%c0_48, %c0_49] : memref<1x1xf32, #tpu.memory_space<vmem>>, vector<1x1xf32>
      %cst_50 = arith.constant -1.250000e-01 : f32
      %90 = vector.broadcast %cst_50 : f32 to vector<1x1xf32>
      %91 = arith.mulf %89, %90 : vector<1x1xf32>
      %c0_51 = arith.constant 0 : index
      %c0_52 = arith.constant 0 : index
      %92 = vector.load %arg7[%c0_51, %c0_52] : memref<1x1xf32, #tpu.memory_space<vmem>>, vector<1x1xf32>
      tpu.vector_store %arg7[%c0_51, %c0_52], %91 {strides = array<i32>} : memref<1x1xf32, #tpu.memory_space<vmem>>, vector<1x1xf32>,
      %c0_53 = arith.constant 0 : index
      %c0_54 = arith.constant 0 : index
      %93 = vector.load %arg12[%c0_53, %c0_54] : memref<1x128xf32, #tpu.memory_space<vmem>>, vector<1x128xf32>
      %c0_55 = arith.constant 0 : index
      %c0_56 = arith.constant 0 : index
      %94 = vector.load %arg10[%c0_55, %c0_56] : memref<1x128xf32, #tpu.memory_space<vmem>>, vector<1x128xf32>
      %cst_57 = arith.constant 1.000000e-30 : f32
      %95 = vector.broadcast %cst_57 : f32 to vector<1x128xf32>
      %96 = arith.maximumf %94, %95 : vector<1x128xf32>
      %97 = math.log %96 : vector<1x128xf32>
      %cst_58 = arith.constant 1.000000e+01 : f32
      %98 = vector.broadcast %cst_58 : f32 to vector<1x128xf32>
      %99 = arith.addf %97, %98 : vector<1x128xf32>
      %c0_59 = arith.constant 0 : index
      %c0_60 = arith.constant 0 : index
      %100 = vector.load %arg11[%c0_59, %c0_60] : memref<1x128xf32, #tpu.memory_space<vmem>>, vector<1x128xf32>
      %101 = arith.mulf %93, %99 : vector<1x128xf32>
      %102 = arith.subf %100, %101 : vector<1x128xf32>
      %cst_61 = arith.constant 1.000000e+00 : f32
      %103 = vector.broadcast %cst_61 : f32 to vector<1x128xf32>
      %104 = arith.maximumf %93, %103 : vector<1x128xf32>
      %105 = tpu.reciprocal %104 {approx = true} : vector<1x128xf32> -> vector<1x128xf32>
      %106 = arith.mulf %102, %105 : vector<1x128xf32>
      %cst_62 = arith.constant 0.000000e+00 : f32
      %107 = vector.broadcast %cst_62 : f32 to vector<1x128xf32>
      %108 = arith.cmpf ogt, %93, %107 : vector<1x128xf32>
      %109 = arith.extui %108 : vector<1x128xi1> to vector<1x128xi32>
      %110 = arith.sitofp %109 : vector<1x128xi32> to vector<1x128xf32>
      %cst_63 = arith.constant dense<0.000000e+00> : vector<1xf32>
      %111 = vector.multi_reduction <add>, %110, %cst_63 [1] : vector<1x128xf32> to vector<1xf32>
      %112 = vector.shape_cast %111 : vector<1xf32> to vector<1x1xf32>
      %cst_64 = arith.constant 1.000000e+00 : f32
      %113 = vector.broadcast %cst_64 : f32 to vector<1x1xf32>
      %114 = arith.maximumf %112, %113 : vector<1x1xf32>
      %115 = arith.mulf %106, %110 : vector<1x128xf32>
      %cst_65 = arith.constant dense<0.000000e+00> : vector<1xf32>
      %116 = vector.multi_reduction <add>, %115, %cst_65 [1] : vector<1x128xf32> to vector<1xf32>
      %117 = vector.shape_cast %116 : vector<1xf32> to vector<1x1xf32>
      %cst_66 = arith.constant 0.000000e+00 : f32
      %118 = vector.broadcast %cst_66 : f32 to vector<1x1xf32>
      %119 = arith.subf %118, %117 : vector<1x1xf32>
      %120 = tpu.reciprocal %114 {approx = true} : vector<1x1xf32> -> vector<1x1xf32>
      %121 = arith.mulf %119, %120 : vector<1x1xf32>
      %c0_67 = arith.constant 0 : index
      %c0_68 = arith.constant 0 : index
      %122 = vector.load %arg8[%c0_67, %c0_68] : memref<1x1xf32, #tpu.memory_space<vmem>>, vector<1x1xf32>
      tpu.vector_store %arg8[%c0_67, %c0_68], %121 {strides = array<i32>} : memref<1x1xf32, #tpu.memory_space<vmem>>, vector<1x1xf32>,
    } else {
    }
    return
  }
  func.func @transform_0(%arg0: i32) -> (i32, i32) {
    %c0_i32 = arith.constant 0 : i32
    %c0_i32_0 = arith.constant 0 : i32
    return %arg0, %c0_i32 : i32, i32
  }
  func.func @transform_1(%arg0: i32) -> (i32, i32) {
    %c0_i32 = arith.constant 0 : i32
    %c0_i32_0 = arith.constant 0 : i32
    %c0_i32_1 = arith.constant 0 : i32
    return %c0_i32, %c0_i32_0 : i32, i32
  }
  func.func @transform_2(%arg0: i32) -> (i32, i32) {
    %c0_i32 = arith.constant 0 : i32
    %c0_i32_0 = arith.constant 0 : i32
    %c0_i32_1 = arith.constant 0 : i32
    return %c0_i32, %c0_i32_0 : i32, i32
  }
  func.func @transform_3(%arg0: i32) -> (i32, i32) {
    %c0_i32 = arith.constant 0 : i32
    %c0_i32_0 = arith.constant 0 : i32
    %c0_i32_1 = arith.constant 0 : i32
    return %c0_i32, %c0_i32_0 : i32, i32
  }
  func.func @transform_4(%arg0: i32) -> (i32, i32) {
    %c0_i32 = arith.constant 0 : i32
    %c0_i32_0 = arith.constant 0 : i32
    return %arg0, %c0_i32 : i32, i32
  }
  func.func @transform_5(%arg0: i32) -> (i32, i32) {
    %c0_i32 = arith.constant 0 : i32
    %c0_i32_0 = arith.constant 0 : i32
    return %arg0, %c0_i32 : i32, i32
  }
  func.func @transform_6(%arg0: i32) -> (i32, i32) {
    %c0_i32 = arith.constant 0 : i32
    %c0_i32_0 = arith.constant 0 : i32
    %c0_i32_1 = arith.constant 0 : i32
    return %c0_i32, %c0_i32_0 : i32, i32
  }
  func.func @transform_7(%arg0: i32) -> (i32, i32) {
    %c0_i32 = arith.constant 0 : i32
    %c0_i32_0 = arith.constant 0 : i32
    %c0_i32_1 = arith.constant 0 : i32
    return %c0_i32, %c0_i32_0 : i32, i32
  }
}

</mosaic_0001>

<llo_original>
// kernel: tpu_custom_call.1
$region0: #{tpu_custom_call.1}
  #allocation0 [shape = 'u32[]', space=smem, size = 0x4, offset = 0x4, fixed_abs, tag = 'smem constant byte address 0x4 - core index']
  #allocation1 [shape = 'u32[144,128]{1,0:T(1,128)}', space=vmem, size = 0x12000, scoped, tag = 'internal scratch']
  #allocation2 [shape = 'bf16[128,128]{1,0:T(16,128)(2,1)}', space=vmem, size = 0x8000, scoped, tag = 'scratch operand']
  #allocation3 [shape = 'f32[1,128]{1,0:T(1,128)}', space=vmem, size = 0x200, scoped, tag = 'scratch operand']
  #allocation4 [shape = 'f32[1,128]{1,0:T(1,128)}', space=vmem, size = 0x200, scoped, tag = 'scratch operand']
  #allocation5 [shape = 'f32[1,128]{1,0:T(1,128)}', space=vmem, size = 0x200, scoped, tag = 'scratch operand']
  %s0 = inlined_call_operand.hbm [shape: bf16[8,768], index: 0, kind: input, shape index: {}]
  %s1 = inlined_call_operand.hbm [shape: bf16[128,768], index: 1, kind: input, shape index: {}]
  %s2 = inlined_call_operand.hbm [shape: bf16[768,128], index: 2, kind: input, shape index: {}]
  %s3 = inlined_call_operand.vmem [shape: f32[1,128], index: 3, kind: input, shape index: {}]
  %s4 = inlined_call_operand.vmem [shape: s8[8,128], index: 4, kind: input, shape index: {}]
  %s5 = inlined_call_operand.hbm [shape: f32[8,128], index: 5, kind: output, shape index: {0}]
  %s6 = inlined_call_operand.hbm [shape: f32[1,1], index: 6, kind: output, shape index: {1}]
  %s7 = inlined_call_operand.hbm [shape: f32[1,1], index: 7, kind: output, shape index: {2}]
  %8 = xla_tuple %s5, %s6, %s7
  %s9 = sld [smem:[#allocation0]]
  $region66: #{tpu_custom_call.1} parent=0
    _
  %s11 = ssub.s32 1, %s9
  %s12 = scalar_select 0, %s11, %s9
  $region1: #{tpu_custom_call.1} parent=0
    #allocation6 [shape = 'u8[12288]{0}', space=vmem, size = 0x3000, scoped, tag = 'input window, operand 0, single buffered']
    #allocation7 [shape = 's32[1]{0}', space=sflag, size = 0x4, scoped, tag = 'scoped memory for tpu_custom_call.1']
    #allocation8 [shape = 's32[1]{0}', space=sflag, size = 0x4, scoped, tag = 'scoped memory for tpu_custom_call.1']
    #allocation9 [shape = 'u8[196608]{0}', space=vmem, size = 0x30000, scoped, tag = 'input window, operand 1, single buffered']
    #allocation10 [shape = 's32[1]{0}', space=sflag, size = 0x4, scoped, tag = 'scoped memory for tpu_custom_call.1']
    #allocation11 [shape = 'u8[196608]{0}', space=vmem, size = 0x30000, scoped, tag = 'input window, operand 2, single buffered']
    #allocation12 [shape = 'u8[4096]{0}', space=vmem, size = 0x1000, scoped, tag = 'output window, operand 0, single buffered']
    #allocation13 [shape = 'u8[512]{0}', space=vmem, size = 0x400, scoped, tag = 'output window, operand 1, single buffered']
    #allocation14 [shape = 's32[1]{0}', space=sflag, size = 0x4, scoped, tag = 'scoped memory for tpu_custom_call.1']
    #allocation15 [shape = 'u8[512]{0}', space=vmem, size = 0x400, scoped, tag = 'output window, operand 2, single buffered']
    %13 = vsyncpa [#allocation7], 0
    %14 = vsyncpa [#allocation10], 0
    %15 = vsyncpa [#allocation8], 0
    %16 = vsyncpa [#allocation14], 0
    // Predicated region
    $region2: #{tpu_custom_call.1} parent=1 // pred_check
      _
    $region3: #{tpu_custom_call.1} parent=1 // pred_check_branch
      %18 = sbr.rel (0) target = $region5
    $region4: #{tpu_custom_call.1} parent=1 // pred_region
      %s20 = ssub.s32 384, 384
      %21 = vsyncadd [#allocation7], %s20
      %s23 = sshll.u32 [#allocation6], 4
      %s24 = int_to_ptr.vmem [resolvable:$true] %s23
      %26 = dma.hbm_to_vmem [thread:$0]  %s0, 384, %s24, [#allocation7]
    $region5: #{tpu_custom_call.1} parent=1 // pred_fallthru
      _
    // Predicated region
    $region6: #{tpu_custom_call.1} parent=1 // pred_check
      _
    $region7: #{tpu_custom_call.1} parent=1 // pred_check_branch
      %28 = sbr.rel (0) target = $region9
    $region8: #{tpu_custom_call.1} parent=1 // pred_region
      %s30 = ssub.s32 6144, 6144
      %31 = vsyncadd [#allocation10], %s30
      %s32 = sshll.u32 [#allocation9], 4
      %s33 = int_to_ptr.vmem [resolvable:$true] %s32
      %38 = dma.hbm_to_vmem [thread:$0]  %s1, 6144, %s33, [#allocation10], 384, 384, 24
    $region9: #{tpu_custom_call.1} parent=1 // pred_fallthru
      _
    // Predicated region
    $region10: #{tpu_custom_call.1} parent=1 // pred_check
      _
    $region11: #{tpu_custom_call.1} parent=1 // pred_check_branch
      %40 = sbr.rel (0) target = $region13
    $region12: #{tpu_custom_call.1} parent=1 // pred_region
      %s42 = ssub.s32 6144, 6144
      %43 = vsyncadd [#allocation10], %s42
      %s44 = sshll.u32 [#allocation11], 4
      %s45 = int_to_ptr.vmem [resolvable:$true] %s44
      %50 = dma.hbm_to_vmem [thread:$0]  %s2, 6144, %s45, [#allocation10], 64, 64, 4
    $region13: #{tpu_custom_call.1} parent=1 // pred_fallthru
      _
    // Predicated region
    $region14: #{tpu_custom_call.1} parent=1 // pred_check
      _
    $region15: #{tpu_custom_call.1} parent=1 // pred_check_branch
      %52 = sbr.rel (0) target = $region17
    $region16: #{tpu_custom_call.1} parent=1 // pred_region
      _
    $region17: #{tpu_custom_call.1} parent=1 // pred_fallthru
      _
    // Predicated region
    $region18: #{tpu_custom_call.1} parent=1 // pred_check
      _
    $region19: #{tpu_custom_call.1} parent=1 // pred_check_branch
      %54 = sbr.rel (0) target = $region21
    $region20: #{tpu_custom_call.1} parent=1 // pred_region
      _
    $region21: #{tpu_custom_call.1} parent=1 // pred_fallthru
      _
    // Predicated region
    $region22: #{tpu_custom_call.1} parent=1 // pred_check
      _
    $region23: #{tpu_custom_call.1} parent=1 // pred_check_branch
      %56 = sbr.rel (0) target = $region25
    $region24: #{tpu_custom_call.1} parent=1 // pred_region
      %57 = dma.done [#allocation7], 384
    $region25: #{tpu_custom_call.1} parent=1 // pred_fallthru
      _
    // Predicated region
    $region26: #{tpu_custom_call.1} parent=1 // pred_check
      _
    $region27: #{tpu_custom_call.1} parent=1 // pred_check_branch
      %59 = sbr.rel (0) target = $region29
    $region28: #{tpu_custom_call.1} parent=1 // pred_region
      %60 = dma.done [#allocation10], 6144
    $region29: #{tpu_custom_call.1} parent=1 // pred_fallthru
      _
    // Predicated region
    $region30: #{tpu_custom_call.1} parent=1 // pred_check
      _
    $region31: #{tpu_custom_call.1} parent=1 // pred_check_branch
      %62 = sbr.rel (0) target = $region33
    $region32: #{tpu_custom_call.1} parent=1 // pred_region
      %63 = dma.done [#allocation10], 6144
    $region33: #{tpu_custom_call.1} parent=1 // pred_fallthru
      _
    %p65 = scmp.eq.s32.totalorder 0, 0
    // Predicated region
    $region34: #{tpu_custom_call.1} parent=1 // pred_check
      %p66 = pneg %p65
    $region35: #{tpu_custom_call.1} parent=1 // pred_check_branch
      %68 = sbr.rel (%p66) target = $region37
    $region36: #{tpu_custom_call.1} parent=1 // pred_region
      %v69 = vld [vmem:[#allocation9] sm:$0xff]
      %v70 = vld [vmem:[#allocation9 + $0x8] sm:$0xff]
      %v71 = vld [vmem:[#allocation9 + $0x10] sm:$0xff]
      %v72 = vld [vmem:[#allocation9 + $0x18] sm:$0xff]
      %v73 = vld [vmem:[#allocation9 + $0x20] sm:$0xff]
      %v74 = vld [vmem:[#allocation9 + $0x28] sm:$0xff]
      %v75 = vld [vmem:[#allocation9 + $0x30] sm:$0xff]
      %v76 = vld [vmem:[#allocation9 + $0x38] sm:$0xff]
      %v77 = vld [vmem:[#allocation9 + $0x40] sm:$0xff]
      %v78 = vld [vmem:[#allocation9 + $0x48] sm:$0xff]
      %v79 = vld [vmem:[#allocation9 + $0x50] sm:$0xff]
      %v80 = vld [vmem:[#allocation9 + $0x58] sm:$0xff]
      %v81 = vld [vmem:[#allocation9 + $0x60] sm:$0xff]
      %v82 = vld [vmem:[#allocation9 + $0x68] sm:$0xff]
      %v83 = vld [vmem:[#allocation9 + $0x70] sm:$0xff]
      %v84 = vld [vmem:[#allocation9 + $0x78] sm:$0xff]
      %v85 = vld [vmem:[#allocation9 + $0x80] sm:$0xff]
      %v86 = vld [vmem:[#allocation9 + $0x88] sm:$0xff]
      %v87 = vld [vmem:[#allocation9 + $0x90] sm:$0xff]
      %v88 = vld [vmem:[#allocation9 + $0x98] sm:$0xff]
      %v89 = vld [vmem:[#allocation9 + $0xa0] sm:$0xff]
      %v90 = vld [vmem:[#allocation9 + $0xa8] sm:$0xff]
      %v91 = vld [vmem:[#allocation9 + $0xb0] sm:$0xff]
      %v92 = vld [vmem:[#allocation9 + $0xb8] sm:$0xff]
      %v93 = vld [vmem:[#allocation9 + $0xc0] sm:$0xff]
      %v94 = vld [vmem:[#allocation9 + $0xc8] sm:$0xff]
      %v95 = vld [vmem:[#allocation9 + $0xd0] sm:$0xff]
      %v96 = vld [vmem:[#allocation9 + $0xd8] sm:$0xff]
      %v97 = vld [vmem:[#allocation9 + $0xe0] sm:$0xff]
      %v98 = vld [vmem:[#allocation9 + $0xe8] sm:$0xff]
      %v99 = vld [vmem:[#allocation9 + $0xf0] sm:$0xff]
      %v100 = vld [vmem:[#allocation9 + $0xf8] sm:$0xff]
      %v101 = vld [vmem:[#allocation9 + $0x100] sm:$0xff]
      %v102 = vld [vmem:[#allocation9 + $0x108] sm:$0xff]
      %v103 = vld [vmem:[#allocation9 + $0x110] sm:$0xff]
      %v104 = vld [vmem:[#allocation9 + $0x118] sm:$0xff]
      %v105 = vld [vmem:[#allocation9 + $0x120] sm:$0xff]
      %v106 = vld [vmem:[#allocation9 + $0x128] sm:$0xff]
      %v107 = vld [vmem:[#allocation9 + $0x130] sm:$0xff]
      %v108 = vld [vmem:[#allocation9 + $0x138] sm:$0xff]
      %v109 = vld [vmem:[#allocation9 + $0x140] sm:$0xff]
      %v110 = vld [vmem:[#allocation9 + $0x148] sm:$0xff]
      %v111 = vld [vmem:[#allocation9 + $0x150] sm:$0xff]
      %v112 = vld [vmem:[#allocation9 + $0x158] sm:$0xff]
      %v113 = vld [vmem:[#allocation9 + $0x160] sm:$0xff]
      %v114 = vld [vmem:[#allocation9 + $0x168] sm:$0xff]
      %v115 = vld [vmem:[#allocation9 + $0x170] sm:$0xff]
      %v116 = vld [vmem:[#allocation9 + $0x178] sm:$0xff]
      %v117 = vld [vmem:[#allocation11] sm:$0xf]
      %v118 = vld [vmem:[#allocation11 + $0x4] sm:$0xf]
      %v119 = vld [vmem:[#allocation11 + $0x8] sm:$0xf]
      %v120 = vld [vmem:[#allocation11 + $0xc] sm:$0xf]
      %v121 = vld [vmem:[#allocation11 + $0x10] sm:$0xf]
      %v122 = vld [vmem:[#allocation11 + $0x14] sm:$0xf]
      %v123 = vld [vmem:[#allocation11 + $0x18] sm:$0xf]
      %v124 = vld [vmem:[#allocation11 + $0x1c] sm:$0xf]
      %v125 = vld [vmem:[#allocation11 + $0x20] sm:$0xf]
      %v126 = vld [vmem:[#allocation11 + $0x24] sm:$0xf]
      %v127 = vld [vmem:[#allocation11 + $0x28] sm:$0xf]
      %v128 = vld [vmem:[#allocation11 + $0x2c] sm:$0xf]
      %v129 = vld [vmem:[#allocation11 + $0x30] sm:$0xf]
      %v130 = vld [vmem:[#allocation11 + $0x34] sm:$0xf]
      %v131 = vld [vmem:[#allocation11 + $0x38] sm:$0xf]
      %v132 = vld [vmem:[#allocation11 + $0x3c] sm:$0xf]
      %v133 = vld [vmem:[#allocation11 + $0x40] sm:$0xf]
      %v134 = vld [vmem:[#allocation11 + $0x44] sm:$0xf]
      %v135 = vld [vmem:[#allocation11 + $0x48] sm:$0xf]
      %v136 = vld [vmem:[#allocation11 + $0x4c] sm:$0xf]
      %v137 = vld [vmem:[#allocation11 + $0x50] sm:$0xf]
      %v138 = vld [vmem:[#allocation11 + $0x54] sm:$0xf]
      %v139 = vld [vmem:[#allocation11 + $0x58] sm:$0xf]
      %v140 = vld [vmem:[#allocation11 + $0x5c] sm:$0xf]
      %v141 = vld [vmem:[#allocation11 + $0x60] sm:$0xf]
      %v142 = vld [vmem:[#allocation11 + $0x64] sm:$0xf]
      %v143 = vld [vmem:[#allocation11 + $0x68] sm:$0xf]
      %v144 = vld [vmem:[#allocation11 + $0x6c] sm:$0xf]
      %v145 = vld [vmem:[#allocation11 + $0x70] sm:$0xf]
      %v146 = vld [vmem:[#allocation11 + $0x74] sm:$0xf]
      %v147 = vld [vmem:[#allocation11 + $0x78] sm:$0xf]
      %v148 = vld [vmem:[#allocation11 + $0x7c] sm:$0xf]
      %v149 = vld [vmem:[#allocation11 + $0x80] sm:$0xf]
      %v150 = vld [vmem:[#allocation11 + $0x84] sm:$0xf]
      %v151 = vld [vmem:[#allocation11 + $0x88] sm:$0xf]
      %v152 = vld [vmem:[#allocation11 + $0x8c] sm:$0xf]
      %v153 = vld [vmem:[#allocation11 + $0x90] sm:$0xf]
      %v154 = vld [vmem:[#allocation11 + $0x94] sm:$0xf]
      %v155 = vld [vmem:[#allocation11 + $0x98] sm:$0xf]
      %v156 = vld [vmem:[#allocation11 + $0x9c] sm:$0xf]
      %v157 = vld [vmem:[#allocation11 + $0xa0] sm:$0xf]
      %v158 = vld [vmem:[#allocation11 + $0xa4] sm:$0xf]
      %v159 = vld [vmem:[#allocation11 + $0xa8] sm:$0xf]
      %v160 = vld [vmem:[#allocation11 + $0xac] sm:$0xf]
      %v161 = vld [vmem:[#allocation11 + $0xb0] sm:$0xf]
      %v162 = vld [vmem:[#allocation11 + $0xb4] sm:$0xf]
      %v163 = vld [vmem:[#allocation11 + $0xb8] sm:$0xf]
      %v164 = vld [vmem:[#allocation11 + $0xbc] sm:$0xf]
      %v165 = vld [vmem:[#allocation11 + $0xc0] sm:$0xf]
      %v166 = vld [vmem:[#allocation11 + $0xc4] sm:$0xf]
      %v167 = vld [vmem:[#allocation11 + $0xc8] sm:$0xf]
      %v168 = vld [vmem:[#allocation11 + $0xcc] sm:$0xf]
      %v169 = vld [vmem:[#allocation11 + $0xd0] sm:$0xf]
      %v170 = vld [vmem:[#allocation11 + $0xd4] sm:$0xf]
      %v171 = vld [vmem:[#allocation11 + $0xd8] sm:$0xf]
      %v172 = vld [vmem:[#allocation11 + $0xdc] sm:$0xf]
      %v173 = vld [vmem:[#allocation11 + $0xe0] sm:$0xf]
      %v174 = vld [vmem:[#allocation11 + $0xe4] sm:$0xf]
      %v175 = vld [vmem:[#allocation11 + $0xe8] sm:$0xf]
      %v176 = vld [vmem:[#allocation11 + $0xec] sm:$0xf]
      %v177 = vld [vmem:[#allocation11 + $0xf0] sm:$0xf]
      %v178 = vld [vmem:[#allocation11 + $0xf4] sm:$0xf]
      %v179 = vld [vmem:[#allocation11 + $0xf8] sm:$0xf]
      %v180 = vld [vmem:[#allocation11 + $0xfc] sm:$0xf]
      %v181 = vld [vmem:[#allocation11 + $0x100] sm:$0xf]
      %v182 = vld [vmem:[#allocation11 + $0x104] sm:$0xf]
      %v183 = vld [vmem:[#allocation11 + $0x108] sm:$0xf]
      %v184 = vld [vmem:[#allocation11 + $0x10c] sm:$0xf]
      %v185 = vld [vmem:[#allocation11 + $0x110] sm:$0xf]
      %v186 = vld [vmem:[#allocation11 + $0x114] sm:$0xf]
      %v187 = vld [vmem:[#allocation11 + $0x118] sm:$0xf]
      %v188 = vld [vmem:[#allocation11 + $0x11c] sm:$0xf]
      %v189 = vld [vmem:[#allocation11 + $0x120] sm:$0xf]
      %v190 = vld [vmem:[#allocation11 + $0x124] sm:$0xf]
      %v191 = vld [vmem:[#allocation11 + $0x128] sm:$0xf]
      %v192 = vld [vmem:[#allocation11 + $0x12c] sm:$0xf]
      %v193 = vld [vmem:[#allocation11 + $0x130] sm:$0xf]
      %v194 = vld [vmem:[#allocation11 + $0x134] sm:$0xf]
      %v195 = vld [vmem:[#allocation11 + $0x138] sm:$0xf]
      %v196 = vld [vmem:[#allocation11 + $0x13c] sm:$0xf]
      %v197 = vld [vmem:[#allocation11 + $0x140] sm:$0xf]
      %v198 = vld [vmem:[#allocation11 + $0x144] sm:$0xf]
      %v199 = vld [vmem:[#allocation11 + $0x148] sm:$0xf]
      %v200 = vld [vmem:[#allocation11 + $0x14c] sm:$0xf]
      %v201 = vld [vmem:[#allocation11 + $0x150] sm:$0xf]
      %v202 = vld [vmem:[#allocation11 + $0x154] sm:$0xf]
      %v203 = vld [vmem:[#allocation11 + $0x158] sm:$0xf]
      %v204 = vld [vmem:[#allocation11 + $0x15c] sm:$0xf]
      %v205 = vld [vmem:[#allocation11 + $0x160] sm:$0xf]
      %v206 = vld [vmem:[#allocation11 + $0x164] sm:$0xf]
      %v207 = vld [vmem:[#allocation11 + $0x168] sm:$0xf]
      %v208 = vld [vmem:[#allocation11 + $0x16c] sm:$0xf]
      %v209 = vld [vmem:[#allocation11 + $0x170] sm:$0xf]
      %v210 = vld [vmem:[#allocation11 + $0x174] sm:$0xf]
      %v211 = vld [vmem:[#allocation11 + $0x178] sm:$0xf]
      %v212 = vld [vmem:[#allocation11 + $0x17c] sm:$0xf]
      %v213 = vld [vmem:[%s3] sm:$0x1]
      %v215 = vlaneseq
      %v216 = vshrl.u32 %v215, 7
      %v217 = vsub.s32 0, %v216
      %v218 = vrot.slane %v213, %v217
      %v268 = vunpack.c.l.b16 %v69
      %v269 = vunpack.c.h.b16 %v69
      %v270 = vunpack.c.l.b16 %v70
      %v271 = vunpack.c.h.b16 %v70
      %v272 = vunpack.c.l.b16 %v71
      %v273 = vunpack.c.h.b16 %v71
      %v274 = vunpack.c.l.b16 %v72
      %v275 = vunpack.c.h.b16 %v72
      %v276 = vunpack.c.l.b16 %v73
      %v277 = vunpack.c.h.b16 %v73
      %v278 = vunpack.c.l.b16 %v74
      %v279 = vunpack.c.h.b16 %v74
      %v280 = vunpack.c.l.b16 %v75
      %v281 = vunpack.c.h.b16 %v75
      %v282 = vunpack.c.l.b16 %v76
      %v283 = vunpack.c.h.b16 %v76
      %v284 = vunpack.c.l.b16 %v77
      %v285 = vunpack.c.h.b16 %v77
      %v286 = vunpack.c.l.b16 %v78
      %v287 = vunpack.c.h.b16 %v78
      %v288 = vunpack.c.l.b16 %v79
      %v289 = vunpack.c.h.b16 %v79
      %v290 = vunpack.c.l.b16 %v80
      %v291 = vunpack.c.h.b16 %v80
      %v292 = vunpack.c.l.b16 %v81
      %v293 = vunpack.c.h.b16 %v81
      %v294 = vunpack.c.l.b16 %v82
      %v295 = vunpack.c.h.b16 %v82
      %v296 = vunpack.c.l.b16 %v83
      %v297 = vunpack.c.h.b16 %v83
      %v298 = vunpack.c.l.b16 %v84
      %v299 = vunpack.c.h.b16 %v84
      %v300 = vunpack.c.l.b16 %v85
      %v301 = vunpack.c.h.b16 %v85
      %v302 = vunpack.c.l.b16 %v86
      %v303 = vunpack.c.h.b16 %v86
      %v304 = vunpack.c.l.b16 %v87
      %v305 = vunpack.c.h.b16 %v87
      %v306 = vunpack.c.l.b16 %v88
      %v307 = vunpack.c.h.b16 %v88
      %v308 = vunpack.c.l.b16 %v89
      %v309 = vunpack.c.h.b16 %v89
      %v310 = vunpack.c.l.b16 %v90
      %v311 = vunpack.c.h.b16 %v90
      %v312 = vunpack.c.l.b16 %v91
      %v313 = vunpack.c.h.b16 %v91
      %v314 = vunpack.c.l.b16 %v92
      %v315 = vunpack.c.h.b16 %v92
      %v316 = vunpack.c.l.b16 %v93
      %v317 = vunpack.c.h.b16 %v93
      %v318 = vunpack.c.l.b16 %v94
      %v319 = vunpack.c.h.b16 %v94
      %v320 = vunpack.c.l.b16 %v95
      %v321 = vunpack.c.h.b16 %v95
      %v322 = vunpack.c.l.b16 %v96
      %v323 = vunpack.c.h.b16 %v96
      %v324 = vunpack.c.l.b16 %v97
      %v325 = vunpack.c.h.b16 %v97
      %v326 = vunpack.c.l.b16 %v98
      %v327 = vunpack.c.h.b16 %v98
      %v328 = vunpack.c.l.b16 %v99
      %v329 = vunpack.c.h.b16 %v99
      %v330 = vunpack.c.l.b16 %v100
      %v331 = vunpack.c.h.b16 %v100
      %v332 = vunpack.c.l.b16 %v101
      %v333 = vunpack.c.h.b16 %v101
      %v334 = vunpack.c.l.b16 %v102
      %v335 = vunpack.c.h.b16 %v102
      %v336 = vunpack.c.l.b16 %v103
      %v337 = vunpack.c.h.b16 %v103
      %v338 = vunpack.c.l.b16 %v104
      %v339 = vunpack.c.h.b16 %v104
      %v340 = vunpack.c.l.b16 %v105
      %v341 = vunpack.c.h.b16 %v105
      %v342 = vunpack.c.l.b16 %v106
      %v343 = vunpack.c.h.b16 %v106
      %v344 = vunpack.c.l.b16 %v107
      %v345 = vunpack.c.h.b16 %v107
      %v346 = vunpack.c.l.b16 %v108
      %v347 = vunpack.c.h.b16 %v108
      %v348 = vunpack.c.l.b16 %v109
      %v349 = vunpack.c.h.b16 %v109
      %v350 = vunpack.c.l.b16 %v110
      %v351 = vunpack.c.h.b16 %v110
      %v352 = vunpack.c.l.b16 %v111
      %v353 = vunpack.c.h.b16 %v111
      %v354 = vunpack.c.l.b16 %v112
      %v355 = vunpack.c.h.b16 %v112
      %v356 = vunpack.c.l.b16 %v113
      %v357 = vunpack.c.h.b16 %v113
      %v358 = vunpack.c.l.b16 %v114
      %v359 = vunpack.c.h.b16 %v114
      %v360 = vunpack.c.l.b16 %v115
      %v361 = vunpack.c.h.b16 %v115
      %v362 = vunpack.c.l.b16 %v116
      %v363 = vunpack.c.h.b16 %v116
      %v364 = vpack.c.b16 %v274, %v268
      %v365 = vpack.c.b16 %v275, %v269
      %v366 = vpack.c.b16 %v276, %v270
      %v367 = vpack.c.b16 %v277, %v271
      %v368 = vpack.c.b16 %v278, %v272
      %v369 = vpack.c.b16 %v279, %v273
      %v370 = vpack.c.b16 %v286, %v280
      %v371 = vpack.c.b16 %v287, %v281
      %v372 = vpack.c.b16 %v288, %v282
      %v373 = vpack.c.b16 %v289, %v283
      %v374 = vpack.c.b16 %v290, %v284
      %v375 = vpack.c.b16 %v291, %v285
      %v376 = vpack.c.b16 %v298, %v292
      %v377 = vpack.c.b16 %v299, %v293
      %v378 = vpack.c.b16 %v300, %v294
      %v379 = vpack.c.b16 %v301, %v295
      %v380 = vpack.c.b16 %v302, %v296
      %v381 = vpack.c.b16 %v303, %v297
      %v382 = vpack.c.b16 %v310, %v304
      %v383 = vpack.c.b16 %v311, %v305
      %v384 = vpack.c.b16 %v312, %v306
      %v385 = vpack.c.b16 %v313, %v307
      %v386 = vpack.c.b16 %v314, %v308
      %v387 = vpack.c.b16 %v315, %v309
      %v388 = vpack.c.b16 %v322, %v316
      %v389 = vpack.c.b16 %v323, %v317
      %v390 = vpack.c.b16 %v324, %v318
      %v391 = vpack.c.b16 %v325, %v319
      %v392 = vpack.c.b16 %v326, %v320
      %v393 = vpack.c.b16 %v327, %v321
      %v394 = vpack.c.b16 %v334, %v328
      %v395 = vpack.c.b16 %v335, %v329
      %v396 = vpack.c.b16 %v336, %v330
      %v397 = vpack.c.b16 %v337, %v331
      %v398 = vpack.c.b16 %v338, %v332
      %v399 = vpack.c.b16 %v339, %v333
      %v400 = vpack.c.b16 %v346, %v340
      %v401 = vpack.c.b16 %v347, %v341
      %v402 = vpack.c.b16 %v348, %v342
      %v403 = vpack.c.b16 %v349, %v343
      %v404 = vpack.c.b16 %v350, %v344
      %v405 = vpack.c.b16 %v351, %v345
      %v406 = vpack.c.b16 %v358, %v352
      %v407 = vpack.c.b16 %v359, %v353
      %v408 = vpack.c.b16 %v360, %v354
      %v409 = vpack.c.b16 %v361, %v355
      %v410 = vpack.c.b16 %v362, %v356
      %v411 = vpack.c.b16 %v363, %v357
      %v556 = vunpack.c.l.b16 %v117
      %v557 = vunpack.c.l.b16 %v118
      %v558 = vunpack.c.l.b16 %v119
      %v559 = vunpack.c.l.b16 %v120
      %v560 = vunpack.c.l.b16 %v121
      %v561 = vunpack.c.l.b16 %v122
      %v562 = vunpack.c.l.b16 %v123
      %v563 = vunpack.c.l.b16 %v124
      %v564 = vunpack.c.l.b16 %v125
      %v565 = vunpack.c.l.b16 %v126
      %v566 = vunpack.c.l.b16 %v127
      %v567 = vunpack.c.l.b16 %v128
      %v568 = vunpack.c.l.b16 %v129
      %v569 = vunpack.c.l.b16 %v130
      %v570 = vunpack.c.l.b16 %v131
      %v571 = vunpack.c.l.b16 %v132
      %v572 = vunpack.c.l.b16 %v133
      %v573 = vunpack.c.l.b16 %v134
      %v574 = vunpack.c.l.b16 %v135
      %v575 = vunpack.c.l.b16 %v136
      %v576 = vunpack.c.l.b16 %v137
      %v577 = vunpack.c.l.b16 %v138
      %v578 = vunpack.c.l.b16 %v139
      %v579 = vunpack.c.l.b16 %v140
      %v580 = vunpack.c.l.b16 %v141
      %v581 = vunpack.c.l.b16 %v142
      %v582 = vunpack.c.l.b16 %v143
      %v583 = vunpack.c.l.b16 %v144
      %v584 = vunpack.c.l.b16 %v145
      %v585 = vunpack.c.l.b16 %v146
      %v586 = vunpack.c.l.b16 %v147
      %v587 = vunpack.c.l.b16 %v148
      %v588 = vunpack.c.l.b16 %v149
      %v589 = vunpack.c.l.b16 %v150
      %v590 = vunpack.c.l.b16 %v151
      %v591 = vunpack.c.l.b16 %v152
      %v592 = vunpack.c.l.b16 %v153
      %v593 = vunpack.c.l.b16 %v154
      %v594 = vunpack.c.l.b16 %v155
      %v595 = vunpack.c.l.b16 %v156
      %v596 = vunpack.c.l.b16 %v157
      %v597 = vunpack.c.l.b16 %v158
      %v598 = vunpack.c.l.b16 %v159
      %v599 = vunpack.c.l.b16 %v160
      %v600 = vunpack.c.l.b16 %v161
      %v601 = vunpack.c.l.b16 %v162
      %v602 = vunpack.c.l.b16 %v163
      %v603 = vunpack.c.l.b16 %v164
      %v604 = vunpack.c.l.b16 %v165
      %v605 = vunpack.c.l.b16 %v166
      %v606 = vunpack.c.l.b16 %v167
      %v607 = vunpack.c.l.b16 %v168
      %v608 = vunpack.c.l.b16 %v169
      %v609 = vunpack.c.l.b16 %v170
      %v610 = vunpack.c.l.b16 %v171
      %v611 = vunpack.c.l.b16 %v172
      %v612 = vunpack.c.l.b16 %v173
      %v613 = vunpack.c.l.b16 %v174
      %v614 = vunpack.c.l.b16 %v175
      %v615 = vunpack.c.l.b16 %v176
      %v616 = vunpack.c.l.b16 %v177
      %v617 = vunpack.c.l.b16 %v178
      %v618 = vunpack.c.l.b16 %v179
      %v619 = vunpack.c.l.b16 %v180
      %v620 = vunpack.c.l.b16 %v181
      %v621 = vunpack.c.l.b16 %v182
      %v622 = vunpack.c.l.b16 %v183
      %v623 = vunpack.c.l.b16 %v184
      %v624 = vunpack.c.l.b16 %v185
      %v625 = vunpack.c.l.b16 %v186
      %v626 = vunpack.c.l.b16 %v187
      %v627 = vunpack.c.l.b16 %v188
      %v628 = vunpack.c.l.b16 %v189
      %v629 = vunpack.c.l.b16 %v190
      %v630 = vunpack.c.l.b16 %v191
      %v631 = vunpack.c.l.b16 %v192
      %v632 = vunpack.c.l.b16 %v193
      %v633 = vunpack.c.l.b16 %v194
      %v634 = vunpack.c.l.b16 %v195
      %v635 = vunpack.c.l.b16 %v196
      %v636 = vunpack.c.l.b16 %v197
      %v637 = vunpack.c.l.b16 %v198
      %v638 = vunpack.c.l.b16 %v199
      %v639 = vunpack.c.l.b16 %v200
      %v640 = vunpack.c.l.b16 %v201
      %v641 = vunpack.c.l.b16 %v202
      %v642 = vunpack.c.l.b16 %v203
      %v643 = vunpack.c.l.b16 %v204
      %v644 = vunpack.c.l.b16 %v205
      %v645 = vunpack.c.l.b16 %v206
      %v646 = vunpack.c.l.b16 %v207
      %v647 = vunpack.c.l.b16 %v208
      %v648 = vunpack.c.l.b16 %v209
      %v649 = vunpack.c.l.b16 %v210
      %v650 = vunpack.c.l.b16 %v211
      %v651 = vunpack.c.l.b16 %v212
      %v652 = vpack.c.b16 %v557, %v556
      %v653 = vpack.c.b16 %v559, %v558
      %v654 = vpack.c.b16 %v561, %v560
      %v655 = vpack.c.b16 %v563, %v562
      %v656 = vpack.c.b16 %v565, %v564
      %v657 = vpack.c.b16 %v567, %v566
      %v658 = vpack.c.b16 %v569, %v568
      %v659 = vpack.c.b16 %v571, %v570
      %v660 = vpack.c.b16 %v573, %v572
      %v661 = vpack.c.b16 %v575, %v574
      %v662 = vpack.c.b16 %v577, %v576
      %v663 = vpack.c.b16 %v579, %v578
      %v664 = vpack.c.b16 %v581, %v580
      %v665 = vpack.c.b16 %v583, %v582
      %v666 = vpack.c.b16 %v585, %v584
      %v667 = vpack.c.b16 %v587, %v586
      %v668 = vpack.c.b16 %v589, %v588
      %v669 = vpack.c.b16 %v591, %v590
      %v670 = vpack.c.b16 %v593, %v592
      %v671 = vpack.c.b16 %v595, %v594
      %v672 = vpack.c.b16 %v597, %v596
      %v673 = vpack.c.b16 %v599, %v598
      %v674 = vpack.c.b16 %v601, %v600
      %v675 = vpack.c.b16 %v603, %v602
      %v676 = vpack.c.b16 %v605, %v604
      %v677 = vpack.c.b16 %v607, %v606
      %v678 = vpack.c.b16 %v609, %v608
      %v679 = vpack.c.b16 %v611, %v610
      %v680 = vpack.c.b16 %v613, %v612
      %v681 = vpack.c.b16 %v615, %v614
      %v682 = vpack.c.b16 %v617, %v616
      %v683 = vpack.c.b16 %v619, %v618
      %v684 = vpack.c.b16 %v621, %v620
      %v685 = vpack.c.b16 %v623, %v622
      %v686 = vpack.c.b16 %v625, %v624
      %v687 = vpack.c.b16 %v627, %v626
      %v688 = vpack.c.b16 %v629, %v628
      %v689 = vpack.c.b16 %v631, %v630
      %v690 = vpack.c.b16 %v633, %v632
      %v691 = vpack.c.b16 %v635, %v634
      %v692 = vpack.c.b16 %v637, %v636
      %v693 = vpack.c.b16 %v639, %v638
      %v694 = vpack.c.b16 %v641, %v640
      %v695 = vpack.c.b16 %v643, %v642
      %v696 = vpack.c.b16 %v645, %v644
      %v697 = vpack.c.b16 %v647, %v646
      %v698 = vpack.c.b16 %v649, %v648
      %v699 = vpack.c.b16 %v651, %v650
      %748 = vmatprep.subr.bf16.mxu0 0
      %749 = vmatpush1.bf16.msra.mxu0 %v652
      %750 = vmatprep.subr.bf16.mxu0 0
      %751 = vmatpush1.bf16.msra.mxu0 %v653
      %752 = vmatprep.subr.bf16.mxu0 0
      %753 = vmatpush1.bf16.msra.mxu0 %v654
      %754 = vmatprep.subr.bf16.mxu0 0
      %755 = vmatpush1.bf16.msra.mxu0 %v655
      %756 = vmatprep.subr.bf16.mxu0 0
      %757 = vmatpush1.bf16.msra.mxu0 %v656
      %758 = vmatprep.subr.bf16.mxu0 0
      %759 = vmatpush1.bf16.msra.mxu0 %v657
      %760 = vmatprep.subr.bf16.mxu0 0
      %761 = vmatpush1.bf16.msra.mxu0 %v658
      %762 = vmatprep.subr.bf16.mxu0 0
      %763 = vmatpush1.bf16.msra.mxu0 %v659
      %764 = vmatprep.subr.bf16.mxu0 0
      %765 = vmatpush1.bf16.msra.mxu0 %v660
      %766 = vmatprep.subr.bf16.mxu0 0
      %767 = vmatpush1.bf16.msra.mxu0 %v661
      %768 = vmatprep.subr.bf16.mxu0 0
      %769 = vmatpush1.bf16.msra.mxu0 %v662
      %770 = vmatprep.subr.bf16.mxu0 0
      %771 = vmatpush1.bf16.msra.mxu0 %v663
      %772 = vmatprep.subr.bf16.mxu0 0
      %773 = vmatpush1.bf16.msra.mxu0 %v664
      %774 = vmatprep.subr.bf16.mxu0 0
      %775 = vmatpush1.bf16.msra.mxu0 %v665
      %776 = vmatprep.subr.bf16.mxu0 0
      %777 = vmatpush1.bf16.msra.mxu0 %v666
      %778 = vmatprep.subr.bf16.mxu0 0
      %779 = vmatpush1.bf16.msra.mxu0 %v667
      %780 = vmatprep.mubr.bf16.mxu0 %v365
      %781 = vmatmul.mubr.bf16.gmra.mrb[0].mxu0 %v364
      %v782 = vpop.f32.mrb[0].mxu0
      %v783 = vadd.f32 %v218, %v782
      %v784 = vpop.f32.mrb[0].mxu0
      %v785 = vpop.f32.mrb[0].mxu0
      %v786 = vadd.f32 %v218, %v785
      %v787 = vpop.f32.mrb[0].mxu0
      %788 = vmatprep.mubr.bf16.mxu0 %v371
      %789 = vmatmul.mubr.bf16.gmra.mrb[0].mxu0 %v370
      %v790 = vpop.f32.mrb[0].mxu0
      %v791 = vadd.f32 %v218, %v790
      %v792 = vpop.f32.mrb[0].mxu0
      %v793 = vpop.f32.mrb[0].mxu0
      %v794 = vadd.f32 %v218, %v793
      %v795 = vpop.f32.mrb[0].mxu0
      %796 = vmatprep.mubr.bf16.mxu0 %v377
      %797 = vmatmul.mubr.bf16.gmra.mrb[0].mxu0 %v376
      %v798 = vpop.f32.mrb[0].mxu0
      %v799 = vadd.f32 %v218, %v798
      %v800 = vpop.f32.mrb[0].mxu0
      %v801 = vpop.f32.mrb[0].mxu0
      %v802 = vadd.f32 %v218, %v801
      %v803 = vpop.f32.mrb[0].mxu0
      %804 = vmatprep.mubr.bf16.mxu0 %v383
      %805 = vmatmul.mubr.bf16.gmra.mrb[0].mxu0 %v382
      %v806 = vpop.f32.mrb[0].mxu0
      %v807 = vadd.f32 %v218, %v806
      %v808 = vpop.f32.mrb[0].mxu0
      %v809 = vpop.f32.mrb[0].mxu0
      %v810 = vadd.f32 %v218, %v809
      %v811 = vpop.f32.mrb[0].mxu0
      %812 = vmatprep.mubr.bf16.mxu0 %v389
      %813 = vmatmul.mubr.bf16.gmra.mrb[0].mxu0 %v388
      %v814 = vpop.f32.mrb[0].mxu0
      %v815 = vadd.f32 %v218, %v814
      %v816 = vpop.f32.mrb[0].mxu0
      %v817 = vpop.f32.mrb[0].mxu0
      %v818 = vadd.f32 %v218, %v817
      %v819 = vpop.f32.mrb[0].mxu0
      %820 = vmatprep.mubr.bf16.mxu0 %v395
      %821 = vmatmul.mubr.bf16.gmra.mrb[0].mxu0 %v394
      %v822 = vpop.f32.mrb[0].mxu0
      %v823 = vadd.f32 %v218, %v822
      %v824 = vpop.f32.mrb[0].mxu0
      %v825 = vpop.f32.mrb[0].mxu0
      %v826 = vadd.f32 %v218, %v825
      %v827 = vpop.f32.mrb[0].mxu0
      %828 = vmatprep.mubr.bf16.mxu0 %v401
      %829 = vmatmul.mubr.bf16.gmra.mrb[0].mxu0 %v400
      %v830 = vpop.f32.mrb[0].mxu0
      %v831 = vadd.f32 %v218, %v830
      %v832 = vpop.f32.mrb[0].mxu0
      %v833 = vpop.f32.mrb[0].mxu0
      %v834 = vadd.f32 %v218, %v833
      %v835 = vpop.f32.mrb[0].mxu0
      %836 = vmatprep.mubr.bf16.mxu0 %v407
      %837 = vmatmul.mubr.bf16.gmra.mrb[0].mxu0 %v406
      %v838 = vpop.f32.mrb[0].mxu0
      %v839 = vadd.f32 %v218, %v838
      %v840 = vpop.f32.mrb[0].mxu0
      %v841 = vpop.f32.mrb[0].mxu0
      %v842 = vadd.f32 %v218, %v841
      %v843 = vpop.f32.mrb[0].mxu0
      %844 = vdwg.mxu0
      %845 = vmatprep.subr.bf16.mxu0 0
      %846 = vmatpush1.bf16.msra.mxu0 %v668
      %847 = vmatprep.subr.bf16.mxu0 0
      %848 = vmatpush1.bf16.msra.mxu0 %v669
      %849 = vmatprep.subr.bf16.mxu0 0
      %850 = vmatpush1.bf16.msra.mxu0 %v670
      %851 = vmatprep.subr.bf16.mxu0 0
      %852 = vmatpush1.bf16.msra.mxu0 %v671
      %853 = vmatprep.subr.bf16.mxu0 0
      %854 = vmatpush1.bf16.msra.mxu0 %v672
      %855 = vmatprep.subr.bf16.mxu0 0
      %856 = vmatpush1.bf16.msra.mxu0 %v673
      %857 = vmatprep.subr.bf16.mxu0 0
      %858 = vmatpush1.bf16.msra.mxu0 %v674
      %859 = vmatprep.subr.bf16.mxu0 0
      %860 = vmatpush1.bf16.msra.mxu0 %v675
      %861 = vmatprep.subr.bf16.mxu0 0
      %862 = vmatpush1.bf16.msra.mxu0 %v676
      %863 = vmatprep.subr.bf16.mxu0 0
      %864 = vmatpush1.bf16.msra.mxu0 %v677
      %865 = vmatprep.subr.bf16.mxu0 0
      %866 = vmatpush1.bf16.msra.mxu0 %v678
      %867 = vmatprep.subr.bf16.mxu0 0
      %868 = vmatpush1.bf16.msra.mxu0 %v679
      %869 = vmatprep.subr.bf16.mxu0 0
      %870 = vmatpush1.bf16.msra.mxu0 %v680
      %871 = vmatprep.subr.bf16.mxu0 0
      %872 = vmatpush1.bf16.msra.mxu0 %v681
      %873 = vmatprep.subr.bf16.mxu0 0
      %874 = vmatpush1.bf16.msra.mxu0 %v682
      %875 = vmatprep.subr.bf16.mxu0 0
      %876 = vmatpush1.bf16.msra.mxu0 %v683
      %877 = vmatprep.mubr.bf16.mxu0 %v367
      %878 = vmatmul.mubr.bf16.gmra.mrb[0].mxu0 %v366
      %v879 = vpop.f32.mrb[0].mxu0
      %v880 = vadd.f32 %v783, %v879
      %v881 = vpop.f32.mrb[0].mxu0
      %v882 = vpop.f32.mrb[0].mxu0
      %v883 = vadd.f32 %v786, %v882
      %v884 = vpop.f32.mrb[0].mxu0
      %885 = vmatprep.mubr.bf16.mxu0 %v373
      %886 = vmatmul.mubr.bf16.gmra.mrb[0].mxu0 %v372
      %v887 = vpop.f32.mrb[0].mxu0
      %v888 = vadd.f32 %v791, %v887
      %v889 = vpop.f32.mrb[0].mxu0
      %v890 = vpop.f32.mrb[0].mxu0
      %v891 = vadd.f32 %v794, %v890
      %v892 = vpop.f32.mrb[0].mxu0
      %893 = vmatprep.mubr.bf16.mxu0 %v379
      %894 = vmatmul.mubr.bf16.gmra.mrb[0].mxu0 %v378
      %v895 = vpop.f32.mrb[0].mxu0
      %v896 = vadd.f32 %v799, %v895
      %v897 = vpop.f32.mrb[0].mxu0
      %v898 = vpop.f32.mrb[0].mxu0
      %v899 = vadd.f32 %v802, %v898
      %v900 = vpop.f32.mrb[0].mxu0
      %901 = vmatprep.mubr.bf16.mxu0 %v385
      %902 = vmatmul.mubr.bf16.gmra.mrb[0].mxu0 %v384
      %v903 = vpop.f32.mrb[0].mxu0
      %v904 = vadd.f32 %v807, %v903
      %v905 = vpop.f32.mrb[0].mxu0
      %v906 = vpop.f32.mrb[0].mxu0
      %v907 = vadd.f32 %v810, %v906
      %v908 = vpop.f32.mrb[0].mxu0
      %909 = vmatprep.mubr.bf16.mxu0 %v391
      %910 = vmatmul.mubr.bf16.gmra.mrb[0].mxu0 %v390
      %v911 = vpop.f32.mrb[0].mxu0
      %v912 = vadd.f32 %v815, %v911
      %v913 = vpop.f32.mrb[0].mxu0
      %v914 = vpop.f32.mrb[0].mxu0
      %v915 = vadd.f32 %v818, %v914
      %v916 = vpop.f32.mrb[0].mxu0
      %917 = vmatprep.mubr.bf16.mxu0 %v397
      %918 = vmatmul.mubr.bf16.gmra.mrb[0].mxu0 %v396
      %v919 = vpop.f32.mrb[0].mxu0
      %v920 = vadd.f32 %v823, %v919
      %v921 = vpop.f32.mrb[0].mxu0
      %v922 = vpop.f32.mrb[0].mxu0
      %v923 = vadd.f32 %v826, %v922
      %v924 = vpop.f32.mrb[0].mxu0
      %925 = vmatprep.mubr.bf16.mxu0 %v403
      %926 = vmatmul.mubr.bf16.gmra.mrb[0].mxu0 %v402
      %v927 = vpop.f32.mrb[0].mxu0
      %v928 = vadd.f32 %v831, %v927
      %v929 = vpop.f32.mrb[0].mxu0
      %v930 = vpop.f32.mrb[0].mxu0
      %v931 = vadd.f32 %v834, %v930
      %v932 = vpop.f32.mrb[0].mxu0
      %933 = vmatprep.mubr.bf16.mxu0 %v409
      %934 = vmatmul.mubr.bf16.gmra.mrb[0].mxu0 %v408
      %v935 = vpop.f32.mrb[0].mxu0
      %v936 = vadd.f32 %v839, %v935
      %v937 = vpop.f32.mrb[0].mxu0
      %v938 = vpop.f32.mrb[0].mxu0
      %v939 = vadd.f32 %v842, %v938
      %v940 = vpop.f32.mrb[0].mxu0
      %941 = vdwg.mxu0
      %942 = vmatprep.subr.bf16.mxu0 0
      %943 = vmatpush1.bf16.msra.mxu0 %v684
      %944 = vmatprep.subr.bf16.mxu0 0
      %945 = vmatpush1.bf16.msra.mxu0 %v685
      %946 = vmatprep.subr.bf16.mxu0 0
      %947 = vmatpush1.bf16.msra.mxu0 %v686
      %948 = vmatprep.subr.bf16.mxu0 0
      %949 = vmatpush1.bf16.msra.mxu0 %v687
      %950 = vmatprep.subr.bf16.mxu0 0
      %951 = vmatpush1.bf16.msra.mxu0 %v688
      %952 = vmatprep.subr.bf16.mxu0 0
      %953 = vmatpush1.bf16.msra.mxu0 %v689
      %954 = vmatprep.subr.bf16.mxu0 0
      %955 = vmatpush1.bf16.msra.mxu0 %v690
      %956 = vmatprep.subr.bf16.mxu0 0
      %957 = vmatpush1.bf16.msra.mxu0 %v691
      %958 = vmatprep.subr.bf16.mxu0 0
      %959 = vmatpush1.bf16.msra.mxu0 %v692
      %960 = vmatprep.subr.bf16.mxu0 0
      %961 = vmatpush1.bf16.msra.mxu0 %v693
      %962 = vmatprep.subr.bf16.mxu0 0
      %963 = vmatpush1.bf16.msra.mxu0 %v694
      %964 = vmatprep.subr.bf16.mxu0 0
      %965 = vmatpush1.bf16.msra.mxu0 %v695
      %966 = vmatprep.subr.bf16.mxu0 0
      %967 = vmatpush1.bf16.msra.mxu0 %v696
      %968 = vmatprep.subr.bf16.mxu0 0
      %969 = vmatpush1.bf16.msra.mxu0 %v697
      %970 = vmatprep.subr.bf16.mxu0 0
      %971 = vmatpush1.bf16.msra.mxu0 %v698
      %972 = vmatprep.subr.bf16.mxu0 0
      %973 = vmatpush1.bf16.msra.mxu0 %v699
      %974 = vmatprep.mubr.bf16.mxu0 %v369
      %975 = vmatmul.mubr.bf16.gmra.mrb[0].mxu0 %v368
      %v976 = vpop.f32.mrb[0].mxu0
      %v977 = vadd.f32 %v880, %v976
      %v978 = vpop.f32.mrb[0].mxu0
      %v979 = vpop.f32.mrb[0].mxu0
      %v980 = vadd.f32 %v883, %v979
      %v981 = vpop.f32.mrb[0].mxu0
      %982 = vmatprep.mubr.bf16.mxu0 %v375
      %983 = vmatmul.mubr.bf16.gmra.mrb[0].mxu0 %v374
      %v984 = vpop.f32.mrb[0].mxu0
      %v985 = vadd.f32 %v888, %v984
      %v986 = vpop.f32.mrb[0].mxu0
      %v987 = vpop.f32.mrb[0].mxu0
      %v988 = vadd.f32 %v891, %v987
      %v989 = vpop.f32.mrb[0].mxu0
      %990 = vmatprep.mubr.bf16.mxu0 %v381
      %991 = vmatmul.mubr.bf16.gmra.mrb[0].mxu0 %v380
      %v992 = vpop.f32.mrb[0].mxu0
      %v993 = vadd.f32 %v896, %v992
      %v994 = vpop.f32.mrb[0].mxu0
      %v995 = vpop.f32.mrb[0].mxu0
      %v996 = vadd.f32 %v899, %v995
      %v997 = vpop.f32.mrb[0].mxu0
      %998 = vmatprep.mubr.bf16.mxu0 %v387
      %999 = vmatmul.mubr.bf16.gmra.mrb[0].mxu0 %v386
      %v1000 = vpop.f32.mrb[0].mxu0
      %v1001 = vadd.f32 %v904, %v1000
      %v1002 = vpop.f32.mrb[0].mxu0
      %v1003 = vpop.f32.mrb[0].mxu0
      %v1004 = vadd.f32 %v907, %v1003
      %v1005 = vpop.f32.mrb[0].mxu0
      %1006 = vmatprep.mubr.bf16.mxu0 %v393
      %1007 = vmatmul.mubr.bf16.gmra.mrb[0].mxu0 %v392
      %v1008 = vpop.f32.mrb[0].mxu0
      %v1009 = vadd.f32 %v912, %v1008
      %v1010 = vpop.f32.mrb[0].mxu0
      %v1011 = vpop.f32.mrb[0].mxu0
      %v1012 = vadd.f32 %v915, %v1011
      %v1013 = vpop.f32.mrb[0].mxu0
      %1014 = vmatprep.mubr.bf16.mxu0 %v399
      %1015 = vmatmul.mubr.bf16.gmra.mrb[0].mxu0 %v398
      %v1016 = vpop.f32.mrb[0].mxu0
      %v1017 = vadd.f32 %v920, %v1016
      %v1018 = vpop.f32.mrb[0].mxu0
      %v1019 = vpop.f32.mrb[0].mxu0
      %v1020 = vadd.f32 %v923, %v1019
      %v1021 = vpop.f32.mrb[0].mxu0
      %1022 = vmatprep.mubr.bf16.mxu0 %v405
      %1023 = vmatmul.mubr.bf16.gmra.mrb[0].mxu0 %v404
      %v1024 = vpop.f32.mrb[0].mxu0
      %v1025 = vadd.f32 %v928, %v1024
      %v1026 = vpop.f32.mrb[0].mxu0
      %v1027 = vpop.f32.mrb[0].mxu0
      %v1028 = vadd.f32 %v931, %v1027
      %v1029 = vpop.f32.mrb[0].mxu0
      %1030 = vmatprep.mubr.bf16.mxu0 %v411
      %1031 = vmatmul.mubr.bf16.gmra.mrb[0].mxu0 %v410
      %v1032 = vpop.f32.mrb[0].mxu0
      %v1033 = vadd.f32 %v936, %v1032
      %v1034 = vpop.f32.mrb[0].mxu0
      %v1035 = vpop.f32.mrb[0].mxu0
      %v1036 = vadd.f32 %v939, %v1035
      %v1037 = vpop.f32.mrb[0].mxu0
      %1038 = vdwg.mxu0
      %v1039 = vtanh.pop %v977
      %v1040 = vtanh.pop %v980
      %v1041 = vtanh.pop %v985
      %v1042 = vtanh.pop %v988
      %v1043 = vtanh.pop %v993
      %v1044 = vtanh.pop %v996
      %v1045 = vtanh.pop %v1001
      %v1046 = vtanh.pop %v1004
      %v1047 = vtanh.pop %v1009
      %v1048 = vtanh.pop %v1012
      %v1049 = vtanh.pop %v1017
      %v1050 = vtanh.pop %v1020
      %v1051 = vtanh.pop %v1025
      %v1052 = vtanh.pop %v1028
      %v1053 = vtanh.pop %v1033
      %v1054 = vtanh.pop %v1036
      %v1055 = vmul.f32 %v1039, %v1039
      %v1056 = vmul.f32 %v1040, %v1040
      %v1057 = vmul.f32 %v1041, %v1041
      %v1058 = vmul.f32 %v1042, %v1042
      %v1059 = vmul.f32 %v1043, %v1043
      %v1060 = vmul.f32 %v1044, %v1044
      %v1061 = vmul.f32 %v1045, %v1045
      %v1062 = vmul.f32 %v1046, %v1046
      %v1063 = vmul.f32 %v1047, %v1047
      %v1064 = vmul.f32 %v1048, %v1048
      %v1065 = vmul.f32 %v1049, %v1049
      %v1066 = vmul.f32 %v1050, %v1050
      %v1067 = vmul.f32 %v1051, %v1051
      %v1068 = vmul.f32 %v1052, %v1052
      %v1069 = vmul.f32 %v1053, %v1053
      %v1070 = vmul.f32 %v1054, %v1054
      %1071 = vadd.xlane.f32.xlu0 %v1055
      %v1072 = vpop.xlane.xlu0 %1071
      %1073 = vadd.xlane.f32.xlu0 %v1056
      %v1074 = vpop.xlane.xlu0 %1073
      %1075 = vadd.xlane.f32.xlu0 %v1057
      %v1076 = vpop.xlane.xlu0 %1075
      %1077 = vadd.xlane.f32.xlu0 %v1058
      %v1078 = vpop.xlane.xlu0 %1077
      %1079 = vadd.xlane.f32.xlu0 %v1059
      %v1080 = vpop.xlane.xlu0 %1079
      %1081 = vadd.xlane.f32.xlu0 %v1060
      %v1082 = vpop.xlane.xlu0 %1081
      %1083 = vadd.xlane.f32.xlu0 %v1061
      %v1084 = vpop.xlane.xlu0 %1083
      %1085 = vadd.xlane.f32.xlu0 %v1062
      %v1086 = vpop.xlane.xlu0 %1085
      %1087 = vadd.xlane.f32.xlu0 %v1063
      %v1088 = vpop.xlane.xlu0 %1087
      %1089 = vadd.xlane.f32.xlu0 %v1064
      %v1090 = vpop.xlane.xlu0 %1089
      %1091 = vadd.xlane.f32.xlu0 %v1065
      %v1092 = vpop.xlane.xlu0 %1091
      %1093 = vadd.xlane.f32.xlu0 %v1066
      %v1094 = vpop.xlane.xlu0 %1093
      %1095 = vadd.xlane.f32.xlu0 %v1067
      %v1096 = vpop.xlane.xlu0 %1095
      %1097 = vadd.xlane.f32.xlu0 %v1068
      %v1098 = vpop.xlane.xlu0 %1097
      %1099 = vadd.xlane.f32.xlu0 %v1069
      %v1100 = vpop.xlane.xlu0 %1099
      %1101 = vadd.xlane.f32.xlu0 %v1070
      %v1102 = vpop.xlane.xlu0 %1101
      %v1103 = vmax.f32 %v1072, 1e-24
      %v1104 = vmax.f32 %v1074, 1e-24
      %v1105 = vmax.f32 %v1076, 1e-24
      %v1106 = vmax.f32 %v1078, 1e-24
      %v1107 = vmax.f32 %v1080, 1e-24
      %v1108 = vmax.f32 %v1082, 1e-24
      %v1109 = vmax.f32 %v1084, 1e-24
      %v1110 = vmax.f32 %v1086, 1e-24
      %v1111 = vmax.f32 %v1088, 1e-24
      %v1112 = vmax.f32 %v1090, 1e-24
      %v1113 = vmax.f32 %v1092, 1e-24
      %v1114 = vmax.f32 %v1094, 1e-24
      %v1115 = vmax.f32 %v1096, 1e-24
      %v1116 = vmax.f32 %v1098, 1e-24
      %v1117 = vmax.f32 %v1100, 1e-24
      %v1118 = vmax.f32 %v1102, 1e-24
      %v1119 = vrsqrt.pop %v1103
      %v1120 = vrsqrt.pop %v1104
      %v1121 = vrsqrt.pop %v1105
      %v1122 = vrsqrt.pop %v1106
      %v1123 = vrsqrt.pop %v1107
      %v1124 = vrsqrt.pop %v1108
      %v1125 = vrsqrt.pop %v1109
      %v1126 = vrsqrt.pop %v1110
      %v1127 = vrsqrt.pop %v1111
      %v1128 = vrsqrt.pop %v1112
      %v1129 = vrsqrt.pop %v1113
      %v1130 = vrsqrt.pop %v1114
      %v1131 = vrsqrt.pop %v1115
      %v1132 = vrsqrt.pop %v1116
      %v1133 = vrsqrt.pop %v1117
      %v1134 = vrsqrt.pop %v1118
      %v1135 = vmul.f32 %v1039, %v1119
      %v1136 = vmul.f32 %v1040, %v1120
      %v1137 = vmul.f32 %v1041, %v1121
      %v1138 = vmul.f32 %v1042, %v1122
      %v1139 = vmul.f32 %v1043, %v1123
      %v1140 = vmul.f32 %v1044, %v1124
      %v1141 = vmul.f32 %v1045, %v1125
      %v1142 = vmul.f32 %v1046, %v1126
      %v1143 = vmul.f32 %v1047, %v1127
      %v1144 = vmul.f32 %v1048, %v1128
      %v1145 = vmul.f32 %v1049, %v1129
      %v1146 = vmul.f32 %v1050, %v1130
      %v1147 = vmul.f32 %v1051, %v1131
      %v1148 = vmul.f32 %v1052, %v1132
      %v1149 = vmul.f32 %v1053, %v1133
      %v1150 = vmul.f32 %v1054, %v1134
      %1151 = vxpose.xlu0.b32.start [1/16] %v1135, 128
      %1152 = vxpose.xlu0.b32.cont [2/16] %v1136, 128
      %1153 = vxpose.xlu0.b32.cont [3/16] %v1137, 128
      %1154 = vxpose.xlu0.b32.cont [4/16] %v1138, 128
      %1155 = vxpose.xlu0.b32.cont [5/16] %v1139, 128
      %1156 = vxpose.xlu0.b32.cont [6/16] %v1140, 128
      %1157 = vxpose.xlu0.b32.cont [7/16] %v1141, 128
      %1158 = vxpose.xlu0.b32.cont [8/16] %v1142, 128
      %1159 = vxpose.xlu0.b32.cont [9/16] %v1143, 128
      %1160 = vxpose.xlu0.b32.cont [10/16] %v1144, 128
      %1161 = vxpose.xlu0.b32.cont [11/16] %v1145, 128
      %1162 = vxpose.xlu0.b32.cont [12/16] %v1146, 128
      %1163 = vxpose.xlu0.b32.cont [13/16] %v1147, 128
      %1164 = vxpose.xlu0.b32.cont [14/16] %v1148, 128
      %1165 = vxpose.xlu0.b32.cont [15/16] %v1149, 128
      %1166 = vxpose.xlu0.b32.end [16/16] %v1150, 128
      %v1167 = vpop.trf.xlu0
      %v1168 = vpop.trf.xlu0
      %v1169 = vpop.trf.xlu0
      %v1170 = vpop.trf.xlu0
      %v1171 = vpop.trf.xlu0
      %v1172 = vpop.trf.xlu0
      %v1173 = vpop.trf.xlu0
      %v1174 = vpop.trf.xlu0
      %v1175 = vpop.trf.xlu0
      %v1176 = vpop.trf.xlu0
      %v1177 = vpop.trf.xlu0
      %v1178 = vpop.trf.xlu0
      %v1179 = vpop.trf.xlu0
      %v1180 = vpop.trf.xlu0
      %v1181 = vpop.trf.xlu0
      %v1182 = vpop.trf.xlu0
      %v1183 = vpack.c.bf16 %v1168, %v1167
      %v1184 = vpack.c.bf16 %v1170, %v1169
      %v1185 = vpack.c.bf16 %v1172, %v1171
      %v1186 = vpack.c.bf16 %v1174, %v1173
      %v1187 = vpack.c.bf16 %v1176, %v1175
      %v1188 = vpack.c.bf16 %v1178, %v1177
      %v1189 = vpack.c.bf16 %v1180, %v1179
      %v1190 = vpack.c.bf16 %v1182, %v1181
      %1191 = vst [vmem:[#allocation2] sm:$0xff] %v1183
      %1192 = vst [vmem:[#allocation2 + $0x8] sm:$0xff] %v1184
      %1193 = vst [vmem:[#allocation2 + $0x10] sm:$0xff] %v1185
      %1194 = vst [vmem:[#allocation2 + $0x18] sm:$0xff] %v1186
      %1195 = vst [vmem:[#allocation2 + $0x20] sm:$0xff] %v1187
      %1196 = vst [vmem:[#allocation2 + $0x28] sm:$0xff] %v1188
      %1197 = vst [vmem:[#allocation2 + $0x30] sm:$0xff] %v1189
      %1198 = vst [vmem:[#allocation2 + $0x38] sm:$0xff] %v1190
      %vm1199 = vcmask 0
      %1200 = vst.msk [vmem:[#allocation13] sm:$0x1] %vm1199, 0.0
      %1201 = vst [vmem:[#allocation3] sm:$0x1] 0.0
      %1202 = vst [vmem:[#allocation4] sm:$0x1] 0.0
      %1203 = vst [vmem:[#allocation5] sm:$0x1] 0.0
    $region37: #{tpu_custom_call.1} parent=1 // pred_fallthru
      _
    %v1204 = vld [vmem:[#allocation6] sm:$0xff]
    %v1205 = vld [vmem:[#allocation6 + $0x8] sm:$0xff]
    %v1206 = vld [vmem:[#allocation6 + $0x10] sm:$0xff]
    %v1207 = vld [vmem:[#allocation11] sm:$0xf]
    %v1208 = vld [vmem:[#allocation11 + $0x4] sm:$0xf]
    %v1209 = vld [vmem:[#allocation11 + $0x8] sm:$0xf]
    %v1210 = vld [vmem:[#allocation11 + $0xc] sm:$0xf]
    %v1211 = vld [vmem:[#allocation11 + $0x10] sm:$0xf]
    %v1212 = vld [vmem:[#allocation11 + $0x14] sm:$0xf]
    %v1213 = vld [vmem:[#allocation11 + $0x18] sm:$0xf]
    %v1214 = vld [vmem:[#allocation11 + $0x1c] sm:$0xf]
    %v1215 = vld [vmem:[#allocation11 + $0x20] sm:$0xf]
    %v1216 = vld [vmem:[#allocation11 + $0x24] sm:$0xf]
    %v1217 = vld [vmem:[#allocation11 + $0x28] sm:$0xf]
    %v1218 = vld [vmem:[#allocation11 + $0x2c] sm:$0xf]
    %v1219 = vld [vmem:[#allocation11 + $0x30] sm:$0xf]
    %v1220 = vld [vmem:[#allocation11 + $0x34] sm:$0xf]
    %v1221 = vld [vmem:[#allocation11 + $0x38] sm:$0xf]
    %v1222 = vld [vmem:[#allocation11 + $0x3c] sm:$0xf]
    %v1223 = vld [vmem:[#allocation11 + $0x40] sm:$0xf]
    %v1224 = vld [vmem:[#allocation11 + $0x44] sm:$0xf]
    %v1225 = vld [vmem:[#allocation11 + $0x48] sm:$0xf]
    %v1226 = vld [vmem:[#allocation11 + $0x4c] sm:$0xf]
    %v1227 = vld [vmem:[#allocation11 + $0x50] sm:$0xf]
    %v1228 = vld [vmem:[#allocation11 + $0x54] sm:$0xf]
    %v1229 = vld [vmem:[#allocation11 + $0x58] sm:$0xf]
    %v1230 = vld [vmem:[#allocation11 + $0x5c] sm:$0xf]
    %v1231 = vld [vmem:[#allocation11 + $0x60] sm:$0xf]
    %v1232 = vld [vmem:[#allocation11 + $0x64] sm:$0xf]
    %v1233 = vld [vmem:[#allocation11 + $0x68] sm:$0xf]
    %v1234 = vld [vmem:[#allocation11 + $0x6c] sm:$0xf]
    %v1235 = vld [vmem:[#allocation11 + $0x70] sm:$0xf]
    %v1236 = vld [vmem:[#allocation11 + $0x74] sm:$0xf]
    %v1237 = vld [vmem:[#allocation11 + $0x78] sm:$0xf]
    %v1238 = vld [vmem:[#allocation11 + $0x7c] sm:$0xf]
    %v1239 = vld [vmem:[#allocation11 + $0x80] sm:$0xf]
    %v1240 = vld [vmem:[#allocation11 + $0x84] sm:$0xf]
    %v1241 = vld [vmem:[#allocation11 + $0x88] sm:$0xf]
    %v1242 = vld [vmem:[#allocation11 + $0x8c] sm:$0xf]
    %v1243 = vld [vmem:[#allocation11 + $0x90] sm:$0xf]
    %v1244 = vld [vmem:[#allocation11 + $0x94] sm:$0xf]
    %v1245 = vld [vmem:[#allocation11 + $0x98] sm:$0xf]
    %v1246 = vld [vmem:[#allocation11 + $0x9c] sm:$0xf]
    %v1247 = vld [vmem:[#allocation11 + $0xa0] sm:$0xf]
    %v1248 = vld [vmem:[#allocation11 + $0xa4] sm:$0xf]
    %v1249 = vld [vmem:[#allocation11 + $0xa8] sm:$0xf]
    %v1250 = vld [vmem:[#allocation11 + $0xac] sm:$0xf]
    %v1251 = vld [vmem:[#allocation11 + $0xb0] sm:$0xf]
    %v1252 = vld [vmem:[#allocation11 + $0xb4] sm:$0xf]
    %v1253 = vld [vmem:[#allocation11 + $0xb8] sm:$0xf]
    %v1254 = vld [vmem:[#allocation11 + $0xbc] sm:$0xf]
    %v1255 = vld [vmem:[#allocation11 + $0xc0] sm:$0xf]
    %v1256 = vld [vmem:[#allocation11 + $0xc4] sm:$0xf]
    %v1257 = vld [vmem:[#allocation11 + $0xc8] sm:$0xf]
    %v1258 = vld [vmem:[#allocation11 + $0xcc] sm:$0xf]
    %v1259 = vld [vmem:[#allocation11 + $0xd0] sm:$0xf]
    %v1260 = vld [vmem:[#allocation11 + $0xd4] sm:$0xf]
    %v1261 = vld [vmem:[#allocation11 + $0xd8] sm:$0xf]
    %v1262 = vld [vmem:[#allocation11 + $0xdc] sm:$0xf]
    %v1263 = vld [vmem:[#allocation11 + $0xe0] sm:$0xf]
    %v1264 = vld [vmem:[#allocation11 + $0xe4] sm:$0xf]
    %v1265 = vld [vmem:[#allocation11 + $0xe8] sm:$0xf]
    %v1266 = vld [vmem:[#allocation11 + $0xec] sm:$0xf]
    %v1267 = vld [vmem:[#allocation11 + $0xf0] sm:$0xf]
    %v1268 = vld [vmem:[#allocation11 + $0xf4] sm:$0xf]
    %v1269 = vld [vmem:[#allocation11 + $0xf8] sm:$0xf]
    %v1270 = vld [vmem:[#allocation11 + $0xfc] sm:$0xf]
    %v1271 = vld [vmem:[#allocation11 + $0x100] sm:$0xf]
    %v1272 = vld [vmem:[#allocation11 + $0x104] sm:$0xf]
    %v1273 = vld [vmem:[#allocation11 + $0x108] sm:$0xf]
    %v1274 = vld [vmem:[#allocation11 + $0x10c] sm:$0xf]
    %v1275 = vld [vmem:[#allocation11 + $0x110] sm:$0xf]
    %v1276 = vld [vmem:[#allocation11 + $0x114] sm:$0xf]
    %v1277 = vld [vmem:[#allocation11 + $0x118] sm:$0xf]
    %v1278 = vld [vmem:[#allocation11 + $0x11c] sm:$0xf]
    %v1279 = vld [vmem:[#allocation11 + $0x120] sm:$0xf]
    %v1280 = vld [vmem:[#allocation11 + $0x124] sm:$0xf]
    %v1281 = vld [vmem:[#allocation11 + $0x128] sm:$0xf]
    %v1282 = vld [vmem:[#allocation11 + $0x12c] sm:$0xf]
    %v1283 = vld [vmem:[#allocation11 + $0x130] sm:$0xf]
    %v1284 = vld [vmem:[#allocation11 + $0x134] sm:$0xf]
    %v1285 = vld [vmem:[#allocation11 + $0x138] sm:$0xf]
    %v1286 = vld [vmem:[#allocation11 + $0x13c] sm:$0xf]
    %v1287 = vld [vmem:[#allocation11 + $0x140] sm:$0xf]
    %v1288 = vld [vmem:[#allocation11 + $0x144] sm:$0xf]
    %v1289 = vld [vmem:[#allocation11 + $0x148] sm:$0xf]
    %v1290 = vld [vmem:[#allocation11 + $0x14c] sm:$0xf]
    %v1291 = vld [vmem:[#allocation11 + $0x150] sm:$0xf]
    %v1292 = vld [vmem:[#allocation11 + $0x154] sm:$0xf]
    %v1293 = vld [vmem:[#allocation11 + $0x158] sm:$0xf]
    %v1294 = vld [vmem:[#allocation11 + $0x15c] sm:$0xf]
    %v1295 = vld [vmem:[#allocation11 + $0x160] sm:$0xf]
    %v1296 = vld [vmem:[#allocation11 + $0x164] sm:$0xf]
    %v1297 = vld [vmem:[#allocation11 + $0x168] sm:$0xf]
    %v1298 = vld [vmem:[#allocation11 + $0x16c] sm:$0xf]
    %v1299 = vld [vmem:[#allocation11 + $0x170] sm:$0xf]
    %v1300 = vld [vmem:[#allocation11 + $0x174] sm:$0xf]
    %v1301 = vld [vmem:[#allocation11 + $0x178] sm:$0xf]
    %v1302 = vld [vmem:[#allocation11 + $0x17c] sm:$0xf]
    %v1303 = vld [vmem:[%s3] sm:$0x1]
    %v1305 = vlaneseq
    %v1306 = vshrl.u32 %v1305, 7
    %v1307 = vsub.s32 0, %v1306
    %v1308 = vrot.slane %v1303, %v1307
    %v1313 = vunpack.c.l.b16 %v1204
    %v1314 = vunpack.c.h.b16 %v1204
    %v1315 = vunpack.c.l.b16 %v1205
    %v1316 = vunpack.c.h.b16 %v1205
    %v1317 = vunpack.c.l.b16 %v1206
    %v1318 = vunpack.c.h.b16 %v1206
    %v1319 = vpack.c.b16 %v1313, %v1313
    %v1320 = vpack.c.b16 %v1314, %v1314
    %v1321 = vpack.c.b16 %v1315, %v1315
    %v1322 = vpack.c.b16 %v1316, %v1316
    %v1323 = vpack.c.b16 %v1317, %v1317
    %v1324 = vpack.c.b16 %v1318, %v1318
    %v1427 = vunpack.c.l.b16 %v1207
    %v1428 = vunpack.c.l.b16 %v1208
    %v1429 = vunpack.c.l.b16 %v1209
    %v1430 = vunpack.c.l.b16 %v1210
    %v1431 = vunpack.c.l.b16 %v1211
    %v1432 = vunpack.c.l.b16 %v1212
    %v1433 = vunpack.c.l.b16 %v1213
    %v1434 = vunpack.c.l.b16 %v1214
    %v1435 = vunpack.c.l.b16 %v1215
    %v1436 = vunpack.c.l.b16 %v1216
    %v1437 = vunpack.c.l.b16 %v1217
    %v1438 = vunpack.c.l.b16 %v1218
    %v1439 = vunpack.c.l.b16 %v1219
    %v1440 = vunpack.c.l.b16 %v1220
    %v1441 = vunpack.c.l.b16 %v1221
    %v1442 = vunpack.c.l.b16 %v1222
    %v1443 = vunpack.c.l.b16 %v1223
    %v1444 = vunpack.c.l.b16 %v1224
    %v1445 = vunpack.c.l.b16 %v1225
    %v1446 = vunpack.c.l.b16 %v1226
    %v1447 = vunpack.c.l.b16 %v1227
    %v1448 = vunpack.c.l.b16 %v1228
    %v1449 = vunpack.c.l.b16 %v1229
    %v1450 = vunpack.c.l.b16 %v1230
    %v1451 = vunpack.c.l.b16 %v1231
    %v1452 = vunpack.c.l.b16 %v1232
    %v1453 = vunpack.c.l.b16 %v1233
    %v1454 = vunpack.c.l.b16 %v1234
    %v1455 = vunpack.c.l.b16 %v1235
    %v1456 = vunpack.c.l.b16 %v1236
    %v1457 = vunpack.c.l.b16 %v1237
    %v1458 = vunpack.c.l.b16 %v1238
    %v1459 = vunpack.c.l.b16 %v1239
    %v1460 = vunpack.c.l.b16 %v1240
    %v1461 = vunpack.c.l.b16 %v1241
    %v1462 = vunpack.c.l.b16 %v1242
    %v1463 = vunpack.c.l.b16 %v1243
    %v1464 = vunpack.c.l.b16 %v1244
    %v1465 = vunpack.c.l.b16 %v1245
    %v1466 = vunpack.c.l.b16 %v1246
    %v1467 = vunpack.c.l.b16 %v1247
    %v1468 = vunpack.c.l.b16 %v1248
    %v1469 = vunpack.c.l.b16 %v1249
    %v1470 = vunpack.c.l.b16 %v1250
    %v1471 = vunpack.c.l.b16 %v1251
    %v1472 = vunpack.c.l.b16 %v1252
    %v1473 = vunpack.c.l.b16 %v1253
    %v1474 = vunpack.c.l.b16 %v1254
    %v1475 = vunpack.c.l.b16 %v1255
    %v1476 = vunpack.c.l.b16 %v1256
    %v1477 = vunpack.c.l.b16 %v1257
    %v1478 = vunpack.c.l.b16 %v1258
    %v1479 = vunpack.c.l.b16 %v1259
    %v1480 = vunpack.c.l.b16 %v1260
    %v1481 = vunpack.c.l.b16 %v1261
    %v1482 = vunpack.c.l.b16 %v1262
    %v1483 = vunpack.c.l.b16 %v1263
    %v1484 = vunpack.c.l.b16 %v1264
    %v1485 = vunpack.c.l.b16 %v1265
    %v1486 = vunpack.c.l.b16 %v1266
    %v1487 = vunpack.c.l.b16 %v1267
    %v1488 = vunpack.c.l.b16 %v1268
    %v1489 = vunpack.c.l.b16 %v1269
    %v1490 = vunpack.c.l.b16 %v1270
    %v1491 = vunpack.c.l.b16 %v1271
    %v1492 = vunpack.c.l.b16 %v1272
    %v1493 = vunpack.c.l.b16 %v1273
    %v1494 = vunpack.c.l.b16 %v1274
    %v1495 = vunpack.c.l.b16 %v1275
    %v1496 = vunpack.c.l.b16 %v1276
    %v1497 = vunpack.c.l.b16 %v1277
    %v1498 = vunpack.c.l.b16 %v1278
    %v1499 = vunpack.c.l.b16 %v1279
    %v1500 = vunpack.c.l.b16 %v1280
    %v1501 = vunpack.c.l.b16 %v1281
    %v1502 = vunpack.c.l.b16 %v1282
    %v1503 = vunpack.c.l.b16 %v1283
    %v1504 = vunpack.c.l.b16 %v1284
    %v1505 = vunpack.c.l.b16 %v1285
    %v1506 = vunpack.c.l.b16 %v1286
    %v1507 = vunpack.c.l.b16 %v1287
    %v1508 = vunpack.c.l.b16 %v1288
    %v1509 = vunpack.c.l.b16 %v1289
    %v1510 = vunpack.c.l.b16 %v1290
    %v1511 = vunpack.c.l.b16 %v1291
    %v1512 = vunpack.c.l.b16 %v1292
    %v1513 = vunpack.c.l.b16 %v1293
    %v1514 = vunpack.c.l.b16 %v1294
    %v1515 = vunpack.c.l.b16 %v1295
    %v1516 = vunpack.c.l.b16 %v1296
    %v1517 = vunpack.c.l.b16 %v1297
    %v1518 = vunpack.c.l.b16 %v1298
    %v1519 = vunpack.c.l.b16 %v1299
    %v1520 = vunpack.c.l.b16 %v1300
    %v1521 = vunpack.c.l.b16 %v1301
    %v1522 = vunpack.c.l.b16 %v1302
    %v1523 = vpack.c.b16 %v1428, %v1427
    %v1524 = vpack.c.b16 %v1430, %v1429
    %v1525 = vpack.c.b16 %v1432, %v1431
    %v1526 = vpack.c.b16 %v1434, %v1433
    %v1527 = vpack.c.b16 %v1436, %v1435
    %v1528 = vpack.c.b16 %v1438, %v1437
    %v1529 = vpack.c.b16 %v1440, %v1439
    %v1530 = vpack.c.b16 %v1442, %v1441
    %v1531 = vpack.c.b16 %v1444, %v1443
    %v1532 = vpack.c.b16 %v1446, %v1445
    %v1533 = vpack.c.b16 %v1448, %v1447
    %v1534 = vpack.c.b16 %v1450, %v1449
    %v1535 = vpack.c.b16 %v1452, %v1451
    %v1536 = vpack.c.b16 %v1454, %v1453
    %v1537 = vpack.c.b16 %v1456, %v1455
    %v1538 = vpack.c.b16 %v1458, %v1457
    %v1539 = vpack.c.b16 %v1460, %v1459
    %v1540 = vpack.c.b16 %v1462, %v1461
    %v1541 = vpack.c.b16 %v1464, %v1463
    %v1542 = vpack.c.b16 %v1466, %v1465
    %v1543 = vpack.c.b16 %v1468, %v1467
    %v1544 = vpack.c.b16 %v1470, %v1469
    %v1545 = vpack.c.b16 %v1472, %v1471
    %v1546 = vpack.c.b16 %v1474, %v1473
    %v1547 = vpack.c.b16 %v1476, %v1475
    %v1548 = vpack.c.b16 %v1478, %v1477
    %v1549 = vpack.c.b16 %v1480, %v1479
    %v1550 = vpack.c.b16 %v1482, %v1481
    %v1551 = vpack.c.b16 %v1484, %v1483
    %v1552 = vpack.c.b16 %v1486, %v1485
    %v1553 = vpack.c.b16 %v1488, %v1487
    %v1554 = vpack.c.b16 %v1490, %v1489
    %v1555 = vpack.c.b16 %v1492, %v1491
    %v1556 = vpack.c.b16 %v1494, %v1493
    %v1557 = vpack.c.b16 %v1496, %v1495
    %v1558 = vpack.c.b16 %v1498, %v1497
    %v1559 = vpack.c.b16 %v1500, %v1499
    %v1560 = vpack.c.b16 %v1502, %v1501
    %v1561 = vpack.c.b16 %v1504, %v1503
    %v1562 = vpack.c.b16 %v1506, %v1505
    %v1563 = vpack.c.b16 %v1508, %v1507
    %v1564 = vpack.c.b16 %v1510, %v1509
    %v1565 = vpack.c.b16 %v1512, %v1511
    %v1566 = vpack.c.b16 %v1514, %v1513
    %v1567 = vpack.c.b16 %v1516, %v1515
    %v1568 = vpack.c.b16 %v1518, %v1517
    %v1569 = vpack.c.b16 %v1520, %v1519
    %v1570 = vpack.c.b16 %v1522, %v1521
    %1619 = vmatprep.subr.bf16.mxu0 0
    %1620 = vmatpush1.bf16.msra.mxu0 %v1523
    %1621 = vmatprep.subr.bf16.mxu0 0
    %1622 = vmatpush1.bf16.msra.mxu0 %v1524
    %1623 = vmatprep.subr.bf16.mxu0 0
    %1624 = vmatpush1.bf16.msra.mxu0 %v1525
    %1625 = vmatprep.subr.bf16.mxu0 0
    %1626 = vmatpush1.bf16.msra.mxu0 %v1526
    %1627 = vmatprep.subr.bf16.mxu0 0
    %1628 = vmatpush1.bf16.msra.mxu0 %v1527
    %1629 = vmatprep.subr.bf16.mxu0 0
    %1630 = vmatpush1.bf16.msra.mxu0 %v1528
    %1631 = vmatprep.subr.bf16.mxu0 0
    %1632 = vmatpush1.bf16.msra.mxu0 %v1529
    %1633 = vmatprep.subr.bf16.mxu0 0
    %1634 = vmatpush1.bf16.msra.mxu0 %v1530
    %1635 = vmatprep.subr.bf16.mxu0 0
    %1636 = vmatpush1.bf16.msra.mxu0 %v1531
    %1637 = vmatprep.subr.bf16.mxu0 0
    %1638 = vmatpush1.bf16.msra.mxu0 %v1532
    %1639 = vmatprep.subr.bf16.mxu0 0
    %1640 = vmatpush1.bf16.msra.mxu0 %v1533
    %1641 = vmatprep.subr.bf16.mxu0 0
    %1642 = vmatpush1.bf16.msra.mxu0 %v1534
    %1643 = vmatprep.subr.bf16.mxu0 0
    %1644 = vmatpush1.bf16.msra.mxu0 %v1535
    %1645 = vmatprep.subr.bf16.mxu0 0
    %1646 = vmatpush1.bf16.msra.mxu0 %v1536
    %1647 = vmatprep.subr.bf16.mxu0 0
    %1648 = vmatpush1.bf16.msra.mxu0 %v1537
    %1649 = vmatprep.subr.bf16.mxu0 0
    %1650 = vmatpush1.bf16.msra.mxu0 %v1538
    %1651 = vmatprep.mubr.bf16.mxu0 %v1320
    %1652 = vmatmul.mubr.bf16.gmra.mrb[0].mxu0 %v1319
    %v1653 = vpop.f32.mrb[0].mxu0
    %v1654 = vadd.f32 %v1308, %v1653
    %v1655 = vpop.f32.mrb[0].mxu0
    %v1656 = vpop.f32.mrb[0].mxu0
    %v1657 = vpop.f32.mrb[0].mxu0
    %1658 = vdwg.mxu0
    %1659 = vmatprep.subr.bf16.mxu0 0
    %1660 = vmatpush1.bf16.msra.mxu0 %v1539
    %1661 = vmatprep.subr.bf16.mxu0 0
    %1662 = vmatpush1.bf16.msra.mxu0 %v1540
    %1663 = vmatprep.subr.bf16.mxu0 0
    %1664 = vmatpush1.bf16.msra.mxu0 %v1541
    %1665 = vmatprep.subr.bf16.mxu0 0
    %1666 = vmatpush1.bf16.msra.mxu0 %v1542
    %1667 = vmatprep.subr.bf16.mxu0 0
    %1668 = vmatpush1.bf16.msra.mxu0 %v1543
    %1669 = vmatprep.subr.bf16.mxu0 0
    %1670 = vmatpush1.bf16.msra.mxu0 %v1544
    %1671 = vmatprep.subr.bf16.mxu0 0
    %1672 = vmatpush1.bf16.msra.mxu0 %v1545
    %1673 = vmatprep.subr.bf16.mxu0 0
    %1674 = vmatpush1.bf16.msra.mxu0 %v1546
    %1675 = vmatprep.subr.bf16.mxu0 0
    %1676 = vmatpush1.bf16.msra.mxu0 %v1547
    %1677 = vmatprep.subr.bf16.mxu0 0
    %1678 = vmatpush1.bf16.msra.mxu0 %v1548
    %1679 = vmatprep.subr.bf16.mxu0 0
    %1680 = vmatpush1.bf16.msra.mxu0 %v1549
    %1681 = vmatprep.subr.bf16.mxu0 0
    %1682 = vmatpush1.bf16.msra.mxu0 %v1550
    %1683 = vmatprep.subr.bf16.mxu0 0
    %1684 = vmatpush1.bf16.msra.mxu0 %v1551
    %1685 = vmatprep.subr.bf16.mxu0 0
    %1686 = vmatpush1.bf16.msra.mxu0 %v1552
    %1687 = vmatprep.subr.bf16.mxu0 0
    %1688 = vmatpush1.bf16.msra.mxu0 %v1553
    %1689 = vmatprep.subr.bf16.mxu0 0
    %1690 = vmatpush1.bf16.msra.mxu0 %v1554
    %1691 = vmatprep.mubr.bf16.mxu0 %v1322
    %1692 = vmatmul.mubr.bf16.gmra.mrb[0].mxu0 %v1321
    %v1693 = vpop.f32.mrb[0].mxu0
    %v1694 = vadd.f32 %v1654, %v1693
    %v1695 = vpop.f32.mrb[0].mxu0
    %v1696 = vpop.f32.mrb[0].mxu0
    %v1697 = vpop.f32.mrb[0].mxu0
    %1698 = vdwg.mxu0
    %1699 = vmatprep.subr.bf16.mxu0 0
    %1700 = vmatpush1.bf16.msra.mxu0 %v1555
    %1701 = vmatprep.subr.bf16.mxu0 0
    %1702 = vmatpush1.bf16.msra.mxu0 %v1556
    %1703 = vmatprep.subr.bf16.mxu0 0
    %1704 = vmatpush1.bf16.msra.mxu0 %v1557
    %1705 = vmatprep.subr.bf16.mxu0 0
    %1706 = vmatpush1.bf16.msra.mxu0 %v1558
    %1707 = vmatprep.subr.bf16.mxu0 0
    %1708 = vmatpush1.bf16.msra.mxu0 %v1559
    %1709 = vmatprep.subr.bf16.mxu0 0
    %1710 = vmatpush1.bf16.msra.mxu0 %v1560
    %1711 = vmatprep.subr.bf16.mxu0 0
    %1712 = vmatpush1.bf16.msra.mxu0 %v1561
    %1713 = vmatprep.subr.bf16.mxu0 0
    %1714 = vmatpush1.bf16.msra.mxu0 %v1562
    %1715 = vmatprep.subr.bf16.mxu0 0
    %1716 = vmatpush1.bf16.msra.mxu0 %v1563
    %1717 = vmatprep.subr.bf16.mxu0 0
    %1718 = vmatpush1.bf16.msra.mxu0 %v1564
    %1719 = vmatprep.subr.bf16.mxu0 0
    %1720 = vmatpush1.bf16.msra.mxu0 %v1565
    %1721 = vmatprep.subr.bf16.mxu0 0
    %1722 = vmatpush1.bf16.msra.mxu0 %v1566
    %1723 = vmatprep.subr.bf16.mxu0 0
    %1724 = vmatpush1.bf16.msra.mxu0 %v1567
    %1725 = vmatprep.subr.bf16.mxu0 0
    %1726 = vmatpush1.bf16.msra.mxu0 %v1568
    %1727 = vmatprep.subr.bf16.mxu0 0
    %1728 = vmatpush1.bf16.msra.mxu0 %v1569
    %1729 = vmatprep.subr.bf16.mxu0 0
    %1730 = vmatpush1.bf16.msra.mxu0 %v1570
    %1731 = vmatprep.mubr.bf16.mxu0 %v1324
    %1732 = vmatmul.mubr.bf16.gmra.mrb[0].mxu0 %v1323
    %v1733 = vpop.f32.mrb[0].mxu0
    %v1734 = vadd.f32 %v1694, %v1733
    %v1735 = vpop.f32.mrb[0].mxu0
    %v1736 = vpop.f32.mrb[0].mxu0
    %v1737 = vpop.f32.mrb[0].mxu0
    %1738 = vdwg.mxu0
    %v1739 = vtanh.pop %v1734
    %v1740 = vmul.f32 %v1739, %v1739
    %1741 = vadd.xlane.f32.xlu0 %v1740
    %v1742 = vpop.xlane.xlu0 %1741
    %v1743 = vmax.f32 %v1742, 1e-24
    %v1744 = vrsqrt.pop %v1743
    %v1745 = vmul.f32 %v1739, %v1744
    %v1746 = vld [vmem:[%s4] sm:$0x3]
    %v1747 = vunpack.c.0.s8 %v1746
    %v1748 = vcvt.s32.f32 %v1747
    %v1749 = vpack.c.bf16 %v1745, %v1745
    %v1750 = vld [vmem:[#allocation2] sm:$0xff]
    %v1751 = vld [vmem:[#allocation2 + $0x8] sm:$0xff]
    %v1752 = vld [vmem:[#allocation2 + $0x10] sm:$0xff]
    %v1753 = vld [vmem:[#allocation2 + $0x18] sm:$0xff]
    %v1754 = vld [vmem:[#allocation2 + $0x20] sm:$0xff]
    %v1755 = vld [vmem:[#allocation2 + $0x28] sm:$0xff]
    %v1756 = vld [vmem:[#allocation2 + $0x30] sm:$0xff]
    %v1757 = vld [vmem:[#allocation2 + $0x38] sm:$0xff]
    %1758 = vmatprep.subr.bf16.mxu0 0
    %1759 = vmatpush1.bf16.msra.mxu0 %v1750
    %1760 = vmatprep.subr.bf16.mxu0 0
    %1761 = vmatpush1.bf16.msra.mxu0 %v1751
    %1762 = vmatprep.subr.bf16.mxu0 0
    %1763 = vmatpush1.bf16.msra.mxu0 %v1752
    %1764 = vmatprep.subr.bf16.mxu0 0
    %1765 = vmatpush1.bf16.msra.mxu0 %v1753
    %1766 = vmatprep.subr.bf16.mxu0 0
    %1767 = vmatpush1.bf16.msra.mxu0 %v1754
    %1768 = vmatprep.subr.bf16.mxu0 0
    %1769 = vmatpush1.bf16.msra.mxu0 %v1755
    %1770 = vmatprep.subr.bf16.mxu0 0
    %1771 = vmatpush1.bf16.msra.mxu0 %v1756
    %1772 = vmatprep.subr.bf16.mxu0 0
    %1773 = vmatpush1.bf16.msra.mxu0 %v1757
    %1774 = vmatprep.subr.bf16.mxu0 0
    %1775 = vmatpush1.bf16.msra.mxu0 0
    %1776 = vmatprep.subr.bf16.mxu0 0
    %1777 = vmatpush1.bf16.msra.mxu0 0
    %1778 = vmatprep.subr.bf16.mxu0 0
    %1779 = vmatpush1.bf16.msra.mxu0 0
    %1780 = vmatprep.subr.bf16.mxu0 0
    %1781 = vmatpush1.bf16.msra.mxu0 0
    %1782 = vmatprep.subr.bf16.mxu0 0
    %1783 = vmatpush1.bf16.msra.mxu0 0
    %1784 = vmatprep.subr.bf16.mxu0 0
    %1785 = vmatpush1.bf16.msra.mxu0 0
    %1786 = vmatprep.subr.bf16.mxu0 0
    %1787 = vmatpush1.bf16.msra.mxu0 0
    %1788 = vmatprep.subr.bf16.mxu0 0
    %1789 = vmatpush1.bf16.msra.mxu0 0
    %1790 = vmatprep.mubr.bf16.mxu0 0
    %1791 = vmatmul.mubr.bf16.gmra.mrb[0].mxu0 %v1749
    %v1792 = vpop.f32.mrb[0].mxu0
    %v1793 = vadd.f32 0.0, %v1792
    %v1794 = vpop.f32.mrb[0].mxu0
    %v1795 = vpop.f32.mrb[0].mxu0
    %v1796 = vpop.f32.mrb[0].mxu0
    %1797 = vdwg.mxu0
    %v1798 = vmul.f32 %v1793, 10.0
    %v1799 = vlaneseq
    %v1800 = vand.u32 %v1799, 127
    %vm1801 = vcmp.lt.s32.totalorder %v1800, 16
    %v1802 = vsel %vm1801, %v1798, -1e+30
    %1803 = vmax.xlane.f32.xlu0 %v1802
    %v1804 = vpop.xlane.xlu0 %1803
    %v1805 = vsub.f32 %v1802, %v1804
    %v1806 = vmul.f32 %v1805, 1.442695
    %v1807 = vpow.pop %v1806
    %v1808 = vmul.f32 %v1748, %v1798
    %1809 = vadd.xlane.f32.xlu0 %v1807
    %v1810 = vpop.xlane.xlu0 %1809
    %v1811 = vlog2.pop %v1810
    %v1812 = vmul.f32 %v1811, 0.6931472
    %v1813 = vadd.f32 %v1804, %v1812
    %1814 = vadd.xlane.f32.xlu0 %v1748
    %v1815 = vpop.xlane.xlu0 %1814
    %1816 = vadd.xlane.f32.xlu0 %v1808
    %v1817 = vpop.xlane.xlu0 %1816
    %v1818 = vmax.f32 %v1815, 1.0
    %v1819 = vrcp.pop %v1818
    %v1820 = vmul.f32 %v1817, %v1819
    %v1821 = vsub.f32 %v1820, %v1813
    %vm1822 = vcmp.gt.f32.partialorder %v1815, 0.0
    %v1823 = vsel %vm1822, %v1821, 0.0
    %v1824 = vld [vmem:[#allocation13] sm:$0x1]
    %v1825 = vrot.slane %v1823, 4
    %v1826 = vadd.f32 %v1823, %v1825
    %v1827 = vrot.slane %v1826, 2
    %v1828 = vadd.f32 %v1826, %v1827
    %v1829 = vrot.slane %v1828, 1
    %v1830 = vadd.f32 %v1828, %v1829
    %v1831 = vadd.f32 %v1824, %v1830
    %vm1832 = vcmask 0
    %1833 = vst.msk [vmem:[#allocation13] sm:$0x1] %vm1832, %v1831
    %v1834 = vld [vmem:[#allocation3] sm:$0x1]
    %v1835 = vsub.f32 %v1804, 10.0
    %v1836 = vmul.f32 %v1835, 1.442695
    %v1837 = vpow.pop %v1836
    %v1838 = vmul.f32 %v1807, %v1837
    %v1839 = vrot.slane %v1838, 4
    %v1840 = vadd.f32 %v1838, %v1839
    %v1841 = vrot.slane %v1840, 2
    %v1842 = vadd.f32 %v1840, %v1841
    %v1843 = vrot.slane %v1842, 1
    %v1844 = vadd.f32 %v1842, %v1843
    %v1845 = vadd.f32 %v1834, %v1844
    %1846 = vst [vmem:[#allocation3] sm:$0x1] %v1845
    %v1847 = vld [vmem:[#allocation4] sm:$0x1]
    %v1848 = vrot.slane %v1808, 4
    %v1849 = vadd.f32 %v1808, %v1848
    %v1850 = vrot.slane %v1849, 2
    %v1851 = vadd.f32 %v1849, %v1850
    %v1852 = vrot.slane %v1851, 1
    %v1853 = vadd.f32 %v1851, %v1852
    %v1854 = vadd.f32 %v1847, %v1853
    %1855 = vst [vmem:[#allocation4] sm:$0x1] %v1854
    %v1856 = vld [vmem:[#allocation5] sm:$0x1]
    %v1857 = vrot.slane %v1748, 4
    %v1858 = vadd.f32 %v1748, %v1857
    %v1859 = vrot.slane %v1858, 2
    %v1860 = vadd.f32 %v1858, %v1859
    %v1861 = vrot.slane %v1860, 1
    %v1862 = vadd.f32 %v1860, %v1861
    %v1863 = vadd.f32 %v1856, %v1862
    %1864 = vst [vmem:[#allocation5] sm:$0x1] %v1863
    %v1865 = vsub.f32 0.0, %v1804
    %v1866 = vmul.f32 %v1865, 1.442695
    %v1867 = vpow.pop %v1866
    %v1868 = vadd.f32 %v1807, %v1867
    %v1869 = vrcp.pop %v1868
    %v1870 = vmul.f32 %v1807, %v1869
    %1871 = vst [vmem:[#allocation12] sm:$0xff] %v1870
    // Predicated region
    $region38: #{tpu_custom_call.1} parent=1 // pred_check
      %p1872 = pneg %p65
    $region39: #{tpu_custom_call.1} parent=1 // pred_check_branch
      %1874 = sbr.rel (%p1872) target = $region41
    $region40: #{tpu_custom_call.1} parent=1 // pred_region
      %v1875 = vld [vmem:[#allocation13] sm:$0x1]
      %v1876 = vmul.f32 %v1875, -0.125
      %1877 = vst.msk [vmem:[#allocation13] sm:$0x1] %vm1832, %v1876
      %v1878 = vld [vmem:[#allocation5] sm:$0x1]
      %v1879 = vld [vmem:[#allocation3] sm:$0x1]
      %v1880 = vmax.f32 %v1879, 1e-30
      %v1881 = vlog2.pop %v1880
      %v1882 = vmul.f32 %v1881, 0.6931472
      %v1883 = vadd.f32 %v1882, 10.0
      %v1884 = vld [vmem:[#allocation4] sm:$0x1]
      %v1885 = vmul.f32 %v1878, %v1883
      %v1886 = vsub.f32 %v1884, %v1885
      %v1887 = vmax.f32 %v1878, 1.0
      %v1888 = vrcp.pop %v1887
      %v1889 = vmul.f32 %v1886, %v1888
      %vm1890 = vcmp.gt.f32.partialorder %v1878, 0.0
      %v1891 = vsel %vm1890, 1, 0
      %v1892 = vcvt.s32.f32 %v1891
      %vm1893 = vcmask 1040384
      %v1894 = vsel %vm1893, %v1892, 0.0
      %1895 = vadd.xlane.f32.xlu0 %v1894
      %v1896 = vpop.xlane.xlu0 %1895
      %v1897 = vmax.f32 %v1896, 1.0
      %v1898 = vmul.f32 %v1889, %v1892
      %v1899 = vsel %vm1893, %v1898, 0.0
      %1900 = vadd.xlane.f32.xlu0 %v1899
      %v1901 = vpop.xlane.xlu0 %1900
      %v1902 = vsub.f32 0.0, %v1901
      %v1903 = vrcp.pop %v1897
      %v1904 = vmul.f32 %v1902, %v1903
      %1905 = vst.msk [vmem:[#allocation15] sm:$0x1] %vm1832, %v1904
    $region41: #{tpu_custom_call.1} parent=1 // pred_fallthru
      _
    // Predicated region
    $region42: #{tpu_custom_call.1} parent=1 // pred_check
      _
    $region43: #{tpu_custom_call.1} parent=1 // pred_check_branch
      %1907 = sbr.rel (0) target = $region45
    $region44: #{tpu_custom_call.1} parent=1 // pred_region
      %s1909 = ssub.s32 128, 128
      %1910 = vsyncadd [#allocation8], %s1909
      %s1912 = sshll.u32 [#allocation12], 4
      %s1913 = int_to_ptr.vmem [resolvable:$true] %s1912
      %1915 = dma.vmem_to_hbm [thread:$0]  %s1913, 128, %s5, [#allocation8]
    $region45: #{tpu_custom_call.1} parent=1 // pred_fallthru
      _
    // Predicated region
    $region46: #{tpu_custom_call.1} parent=1 // pred_check
      _
    $region47: #{tpu_custom_call.1} parent=1 // pred_check_branch
      %1917 = sbr.rel (0) target = $region49
    $region48: #{tpu_custom_call.1} parent=1 // pred_region
      %s1919 = ssub.s32 16, 16
      %1920 = vsyncadd [#allocation14], %s1919
      %s1922 = sshll.u32 [#allocation13], 4
      %s1923 = int_to_ptr.vmem [resolvable:$true] %s1922
      %1925 = dma.vmem_to_hbm [thread:$0]  %s1923, 16, %s6, [#allocation14]
    $region49: #{tpu_custom_call.1} parent=1 // pred_fallthru
      _
    // Predicated region
    $region50: #{tpu_custom_call.1} parent=1 // pred_check
      _
    $region51: #{tpu_custom_call.1} parent=1 // pred_check_branch
      %1927 = sbr.rel (0) target = $region53
    $region52: #{tpu_custom_call.1} parent=1 // pred_region
      %s1929 = ssub.s32 16, 16
      %1930 = vsyncadd [#allocation14], %s1929
      %s1932 = sshll.u32 [#allocation15], 4
      %s1933 = int_to_ptr.vmem [resolvable:$true] %s1932
      %1935 = dma.vmem_to_hbm [thread:$0]  %s1933, 16, %s7, [#allocation14]
    $region53: #{tpu_custom_call.1} parent=1 // pred_fallthru
      _
    // Predicated region
    $region54: #{tpu_custom_call.1} parent=1 // pred_check
      _
    $region55: #{tpu_custom_call.1} parent=1 // pred_check_branch
      %1937 = sbr.rel (0) target = $region57
    $region56: #{tpu_custom_call.1} parent=1 // pred_region
      %1938 = dma.done [#allocation8], 128
    $region57: #{tpu_custom_call.1} parent=1 // pred_fallthru
      _
    // Predicated region
    $region58: #{tpu_custom_call.1} parent=1 // pred_check
      _
    $region59: #{tpu_custom_call.1} parent=1 // pred_check_branch
      %1940 = sbr.rel (0) target = $region61
    $region60: #{tpu_custom_call.1} parent=1 // pred_region
      %1941 = dma.done [#allocation14], 16
    $region61: #{tpu_custom_call.1} parent=1 // pred_fallthru
      _
    // Predicated region
    $region62: #{tpu_custom_call.1} parent=1 // pred_check
      _
    $region63: #{tpu_custom_call.1} parent=1 // pred_check_branch
      %1943 = sbr.rel (0) target = $region65
    $region64: #{tpu_custom_call.1} parent=1 // pred_region
      %1944 = dma.done [#allocation14], 16
    $region65: #{tpu_custom_call.1} parent=1 // pred_fallthru
      _
    %1945 = vsyncpa [#allocation7], 1
    %1946 = vsyncpa [#allocation10], 1
    %1947 = vsyncpa [#allocation8], 1
    %1948 = vsyncpa [#allocation14], 1

</llo_original>
